<compile_context>
chip_gen: v5e
topology: v5e:2x2
jax: 0.10.0
libtpu: 0.0.40
codegen_flags: <defaults>
</compile_context>

<pallas_src>
import functools

import jax
import jax.numpy as jnp
from jax import lax
from jax.experimental import pallas as pl
from jax.experimental.pallas import tpu as pltpu

LOG_2PI = 1.8378770664093453  # log(2 * pi)


def _gmm_em_kernel(xT_ref, mu0_ref, var0_ref,
                   resp_ref, logp_ref, means_ref, cov_ref, prior_ref,
                   *, n_iter, reg_covar):
    # xT_ref   : (1, F, S) data block, samples on lanes
    # mu0_ref  : (1, K, F) initial means
    # var0_ref : (1, K, F) initial diagonal covariance
    XT = xT_ref[0]                     # (F, S)
    F, S = XT.shape
    XX = XT * XT                       # X^2, invariant across EM iterations

    def _dot(a, b):
        # (K, F) @ (F, S) -> (K, S) on the MXU
        return jnp.dot(a, b, preferred_element_type=jnp.float32)

    def _dot_s(a, b):
        # contract over S (last dim of both): (K, S) x (F, S) -> (K, F)
        return lax.dot_general(a, b, (((1,), (1,)), ((), ())),
                               preferred_element_type=jnp.float32)

    def e_step(mu, var):
        inv_var = pl.reciprocal(var, approx=False)                         # (K, F)
        logdet = jnp.sum(jnp.log(var), axis=1, keepdims=True)              # (K, 1)
        # sum_f inv_var*(x-mu)^2 expanded into two matmuls + a (K,1) constant.
        quad = (_dot(inv_var, XX)
                - 2.0 * _dot(mu * inv_var, XT)
                + jnp.sum(mu * mu * inv_var, axis=1, keepdims=True))       # (K, S)
        logp = -0.5 * (F * LOG_2PI + logdet + quad)                        # (K, S)
        # NOTE: exact PyTorch semantics (exp without max-shift, +1e-8, L1
        # normalize with eps=1e-12). Numerically fragile if log_prob > ~88.
        prob = jnp.exp(logp) + 1e-8
        denom = jnp.maximum(jnp.sum(prob, axis=0, keepdims=True), 1e-12)   # (1, S)
        resp = prob * pl.reciprocal(denom, approx=False)                   # (K, S)
        return resp, logp

    def m_step(resp):
        bottom = jnp.sum(resp, axis=1, keepdims=True)                      # (K, 1)
        inv_bottom = pl.reciprocal(bottom, approx=False)
        mu = _dot_s(resp, XT) * inv_bottom                                 # (K, F)
        # NOTE: matches the PyTorch code exactly (resp enters squared).
        r2 = resp * resp                                                   # (K, S)
        a = _dot_s(r2, XX)                                                 # (K, F)
        b = _dot_s(r2, XT)                                                 # (K, F)
        c = jnp.sum(r2, axis=1, keepdims=True)                             # (K, 1)
        cov = (a - 2.0 * mu * b + mu * mu * c) * inv_bottom                # diag(K,F)
        var = jnp.maximum(cov, reg_covar)                                  # clamp(min=reg_covar)
        return mu, var, bottom

    def em_iter(_, carry):
        mu, var = carry
        resp, _ = e_step(mu, var)
        mu, var, _ = m_step(resp)
        return mu, var

    # n_iter-1 full EM iterations with a tiny (mu, var) carry; final iteration
    # outside the loop so resp/log_prob (last E-step) and mu/var/prior (last
    # M-step) can be written out, matching the PyTorch loop structure.
    mu, var = lax.fori_loop(0, n_iter - 1, em_iter,
                            (mu0_ref[0], var0_ref[0]),
                            unroll=(n_iter <= 8))
    resp, logp = e_step(mu, var)
    mu, var, bottom = m_step(resp)

    resp_ref[0] = resp                 # (K, S) lane-dense store
    logp_ref[0] = logp                 # (K, S) lane-dense store
    means_ref[0] = mu                  # (K, F)
    cov_ref[0] = var                   # (K, F) diagonal
    prior_ref[0] = bottom              # (K, 1) -- already in output layout


def gaussian_mixture_forward(data, *, n_components=4, n_iter=5,
                             covariance_init=1.0, reg_covar=1e-4,
                             key=None, vmem_limit_bytes=None):
    """Equivalent of GaussianMixtureTorch(covariance_type='diag').forward(data)."""
    shape = data.shape
    B, F = shape[0], shape[-1]
    X = data.reshape(B, -1, F).astype(jnp.float32)
    S = X.shape[1]
    K = n_components

    # init_params: means = rows of X sampled at random indices (deterministic key),
    # covariance = covariance_init on the diagonal.
    if key is None:
        key = jax.random.PRNGKey(0)
    idx = jax.random.randint(key, (B, K), 0, S)
    means0 = jnp.take_along_axis(X, idx[:, :, None], axis=1)               # (B, K, F)
    var0 = jnp.full((B, K, F), covariance_init, dtype=jnp.float32)         # (B, K, F)

    # One cheap HBM-side transpose: samples go on lanes inside the kernel.
    XT = jnp.swapaxes(X, 1, 2)                                             # (B, F, S)

    if vmem_limit_bytes is None:
        # Rough per-grid-step VMEM footprint (double-buffered blocks + temps).
        per_batch = 4 * (2 * F * S          # XT input block (x2 buffers)
                         + 4 * K * S        # resp / log_prob output blocks (x2)
                         + F * S            # XX temporary
                         + 2 * K * S        # prob / resp temporaries
                         + 12 * K * F + 16 * K)
        if per_batch > (12 << 20):          # v5e scoped default is only 16 MiB
            vmem_limit_bytes = int(min(2 * per_batch, 56 << 20))  # stay < v7x 64 MiB

    kernel = functools.partial(_gmm_em_kernel, n_iter=n_iter, reg_covar=reg_covar)

    out_shapes = (
        jax.ShapeDtypeStruct((B, K, S), jnp.float32),   # resp (lane-dense, S last)
        jax.ShapeDtypeStruct((B, K, S), jnp.float32),   # log_prob
        jax.ShapeDtypeStruct((B, K, F), jnp.float32),   # means
        jax.ShapeDtypeStruct((B, K, F), jnp.float32),   # diagonal of covariance
        jax.ShapeDtypeStruct((B, K, 1), jnp.float32),   # prior (sum of resp)
    )
    in_specs = [
        pl.BlockSpec((1, F, S), lambda b: (b, 0, 0)),
        pl.BlockSpec((1, K, F), lambda b: (b, 0, 0)),
        pl.BlockSpec((1, K, F), lambda b: (b, 0, 0)),
    ]
    out_specs = (
        pl.BlockSpec((1, K, S), lambda b: (b, 0, 0)),
        pl.BlockSpec((1, K, S), lambda b: (b, 0, 0)),
        pl.BlockSpec((1, K, F), lambda b: (b, 0, 0)),
        pl.BlockSpec((1, K, F), lambda b: (b, 0, 0)),
        pl.BlockSpec((1, K, 1), lambda b: (b, 0, 0)),
    )

    resp_ks, logp_ks, means, cov_diag, prior = pl.pallas_call(
        kernel,
        out_shape=out_shapes,
        grid_spec=pltpu.PrefetchScalarGridSpec(
            num_scalar_prefetch=0,
            grid=(B,),
            in_specs=in_specs,
            out_specs=out_specs,
        ),
        compiler_params=pltpu.CompilerParams(
            dimension_semantics=("parallel",),      # B>=2 feeds both v7x TCs
            vmem_limit_bytes=vmem_limit_bytes,
        ),
    )(XT, means0, var0)

    # _enforce_covariance_type('diag'): full (F, F) matrix with zero off-diagonals.
    covariance = cov_diag[..., None] * jnp.eye(F, dtype=jnp.float32)        # (B, K, F, F)

    resp = jnp.swapaxes(resp_ks, 1, 2).reshape(shape[:-1] + (K,))
    log_prob = jnp.swapaxes(logp_ks, 1, 2).reshape(shape[:-1] + (K,))

    return {
        'resp': resp,
        'log_prob': log_prob,
        'means': means,
        'covariance': covariance,
        'prior': prior.reshape(B, 1, K, 1),
    }


def _ref_forward(data, means0, var0, n_iter, reg_covar):
    """Pure-JAX reference of the same EM loop (diag covariance), direct form."""
    shape = data.shape
    B, F = shape[0], shape[-1]
    X = data.reshape(B, -1, F).astype(jnp.float32)
    mu, var = means0, var0
    resp = log_prob = bottom = None
    for _ in range(n_iter):
        diff = X[:, :, None, :] - mu[:, None, :, :]                         # (B,S,K,F)
        quad = jnp.sum(diff * diff / var[:, None], axis=-1)                 # (B,S,K)
        logdet = jnp.sum(jnp.log(var), axis=-1)                             # (B,K)
        log_prob = -0.5 * (F * LOG_2PI + logdet[:, None, :] + quad)
        prob = jnp.exp(log_prob) + 1e-8
        resp = prob / jnp.maximum(jnp.sum(prob, -1, keepdims=True), 1e-12)
        top = jnp.einsum('bsk,bsf->bkf', resp, X)
        bottom = jnp.sum(resp, axis=1)                                      # (B,K)
        mu = top / bottom[..., None]
        d = (X[:, :, None, :] - mu[:, None]) * resp[..., None]
        cov = jnp.sum(d * d, axis=1) / bottom[..., None]
        var = jnp.maximum(cov, reg_covar)
    return resp, log_prob, mu, var, bottom


if __name__ == "__main__":
    key = jax.random.PRNGKey(0)
    k_data, k_init = jax.random.split(key)

    # data shape (n_batch, ..., n_features); forward flattens middle dims.
    B, T, C, F = 2, 16, 8, 16   # -> X is (2, 128, 16)
    K, N_ITER, REG = 4, 5, 1e-4
    data = jax.random.normal(k_data, (B, T, C, F), dtype=jnp.float32)

    out = gaussian_mixture_forward(data, n_components=K, n_iter=N_ITER,
                                   covariance_init=1.0, reg_covar=REG,
                                   key=k_init)
    out = jax.block_until_ready(out)

    # Sanity checks against a pure-JAX reference using the same deterministic init.
    X = data.reshape(B, -1, F)
    idx = jax.random.randint(k_init, (B, K), 0, X.shape[1])
    means0 = jnp.take_along_axis(X, idx[:, :, None], axis=1)
    var0 = jnp.full((B, K, F), 1.0, dtype=jnp.float32)
    r_resp, r_logp, r_mu, r_var, r_bottom = _ref_forward(data, means0, var0, N_ITER, REG)

    assert bool(jnp.all(jnp.isfinite(out['resp'])))
    assert bool(jnp.allclose(jnp.sum(out['resp'], axis=-1), 1.0, atol=1e-4))
    assert bool(jnp.allclose(out['resp'].reshape(B, -1, K), r_resp, rtol=2e-3, atol=2e-3))
    assert bool(jnp.allclose(out['log_prob'].reshape(B, -1, K), r_logp, rtol=2e-3, atol=2e-2))
    assert bool(jnp.allclose(out['means'], r_mu, rtol=2e-3, atol=2e-3))
    assert bool(jnp.allclose(out['covariance'],
                             r_var[..., None] * jnp.eye(F, dtype=jnp.float32),
                             rtol=2e-3, atol=2e-4))
    assert bool(jnp.allclose(out['prior'].reshape(B, K), r_bottom, rtol=2e-3, atol=2e-3))
    assert out['resp'].shape == (B, T, C, K)
    assert out['log_prob'].shape == (B, T, C, K)
    assert out['covariance'].shape == (B, K, F, F)
    assert out['prior'].shape == (B, 1, K, 1)

    print("KERNEL_OK")
</pallas_src>

<mosaic_0001>
module attributes {stable_mosaic.version = 11 : i64} {
  func.func @_gmm_em_kernel(%arg0: i32, %arg1: memref<1x16x128xf32, #tpu.memory_space<vmem>>, %arg2: memref<1x4x16xf32, #tpu.memory_space<vmem>>, %arg3: memref<1x4x16xf32, #tpu.memory_space<vmem>>, %arg4: memref<1x4x128xf32, #tpu.memory_space<vmem>>, %arg5: memref<1x4x128xf32, #tpu.memory_space<vmem>>, %arg6: memref<1x4x16xf32, #tpu.memory_space<vmem>>, %arg7: memref<1x4x16xf32, #tpu.memory_space<vmem>>, %arg8: memref<1x4x1xf32, #tpu.memory_space<vmem>>) attributes {dimension_semantics = [#tpu.dimension_semantics<parallel>], iteration_bounds = array<i64: 2>, scalar_prefetch = 0 : i64, scratch_operands = 0 : i64, tpu.core_type = #tpu.core_type<tc>, window_params = [{transform_indices = @transform_0, window_bounds = array<i64: 1, 16, 128>}, {transform_indices = @transform_1, window_bounds = array<i64: 1, 4, 16>}, {transform_indices = @transform_2, window_bounds = array<i64: 1, 4, 16>}, {transform_indices = @transform_3, window_bounds = array<i64: 1, 4, 128>}, {transform_indices = @transform_4, window_bounds = array<i64: 1, 4, 128>}, {transform_indices = @transform_5, window_bounds = array<i64: 1, 4, 16>}, {transform_indices = @transform_6, window_bounds = array<i64: 1, 4, 16>}, {transform_indices = @transform_7, window_bounds = array<i64: 1, 4, 1>}]} {
    %c0 = arith.constant 0 : index
    %c0_0 = arith.constant 0 : index
    %c0_1 = arith.constant 0 : index
    %0 = vector.load %arg1[%c0, %c0_0, %c0_1] : memref<1x16x128xf32, #tpu.memory_space<vmem>>, vector<1x16x128xf32>
    %1 = vector.shape_cast %0 : vector<1x16x128xf32> to vector<16x128xf32>
    %2 = arith.mulf %1, %1 : vector<16x128xf32>
    %c0_2 = arith.constant 0 : index
    %c0_3 = arith.constant 0 : index
    %c0_4 = arith.constant 0 : index
    %3 = vector.load %arg2[%c0_2, %c0_3, %c0_4] : memref<1x4x16xf32, #tpu.memory_space<vmem>>, vector<1x4x16xf32>
    %4 = vector.shape_cast %3 : vector<1x4x16xf32> to vector<4x16xf32>
    %c0_5 = arith.constant 0 : index
    %c0_6 = arith.constant 0 : index
    %c0_7 = arith.constant 0 : index
    %5 = vector.load %arg3[%c0_5, %c0_6, %c0_7] : memref<1x4x16xf32, #tpu.memory_space<vmem>>, vector<1x4x16xf32>
    %6 = vector.shape_cast %5 : vector<1x4x16xf32> to vector<4x16xf32>
    %c0_i32 = arith.constant 0 : i32
    %7 = tpu.reciprocal %6 : vector<4x16xf32> -> vector<4x16xf32>
    %8 = math.log %6 : vector<4x16xf32>
    %cst = arith.constant dense<0.000000e+00> : vector<4xf32>
    %9 = vector.multi_reduction <add>, %8, %cst [1] : vector<4x16xf32> to vector<4xf32>
    %10 = vector.shape_cast %9 : vector<4xf32> to vector<4x1xf32>
    %cst_8 = arith.constant dense<0.000000e+00> : vector<4x128xf32>
    %11 = tpu.matmul %7, %2, %cst_8 {dimension_numbers = #tpu.dot_dimension_numbers<[1], [0], [0], [1], [0, 0, 1, 1], [], []>} : vector<4x16xf32>, vector<16x128xf32>, vector<4x128xf32> -> vector<4x128xf32>
    %12 = arith.mulf %4, %7 : vector<4x16xf32>
    %cst_9 = arith.constant dense<0.000000e+00> : vector<4x128xf32>
    %13 = tpu.matmul %12, %1, %cst_9 {dimension_numbers = #tpu.dot_dimension_numbers<[1], [0], [0], [1], [0, 0, 1, 1], [], []>} : vector<4x16xf32>, vector<16x128xf32>, vector<4x128xf32> -> vector<4x128xf32>
    %cst_10 = arith.constant 2.000000e+00 : f32
    %14 = vector.broadcast %cst_10 : f32 to vector<4x128xf32>
    %15 = arith.mulf %14, %13 : vector<4x128xf32>
    %16 = arith.subf %11, %15 : vector<4x128xf32>
    %17 = arith.mulf %4, %4 : vector<4x16xf32>
    %18 = arith.mulf %17, %7 : vector<4x16xf32>
    %cst_11 = arith.constant dense<0.000000e+00> : vector<4xf32>
    %19 = vector.multi_reduction <add>, %18, %cst_11 [1] : vector<4x16xf32> to vector<4xf32>
    %20 = vector.shape_cast %19 : vector<4xf32> to vector<4x1xf32>
    %21 = vector.broadcast %20 : vector<4x1xf32> to vector<4x128xf32>
    %22 = arith.addf %16, %21 : vector<4x128xf32>
    %cst_12 = arith.constant 29.4060326 : f32
    %23 = vector.broadcast %cst_12 : f32 to vector<4x1xf32>
    %24 = arith.addf %23, %10 : vector<4x1xf32>
    %25 = vector.broadcast %24 : vector<4x1xf32> to vector<4x128xf32>
    %26 = arith.addf %25, %22 : vector<4x128xf32>
    %cst_13 = arith.constant -5.000000e-01 : f32
    %27 = vector.broadcast %cst_13 : f32 to vector<4x128xf32>
    %28 = arith.mulf %27, %26 : vector<4x128xf32>
    %29 = math.exp %28 : vector<4x128xf32>
    %cst_14 = arith.constant 9.99999993E-9 : f32
    %30 = vector.broadcast %cst_14 : f32 to vector<4x128xf32>
    %31 = arith.addf %29, %30 : vector<4x128xf32>
    %cst_15 = arith.constant dense<0.000000e+00> : vector<128xf32>
    %32 = vector.multi_reduction <add>, %31, %cst_15 [0] : vector<4x128xf32> to vector<128xf32>
    %33 = vector.shape_cast %32 : vector<128xf32> to vector<1x128xf32>
    %cst_16 = arith.constant 9.99999996E-13 : f32
    %34 = vector.broadcast %cst_16 : f32 to vector<1x128xf32>
    %35 = arith.maximumf %33, %34 : vector<1x128xf32>
    %36 = tpu.reciprocal %35 : vector<1x128xf32> -> vector<1x128xf32>
    %37 = vector.broadcast %36 : vector<1x128xf32> to vector<4x128xf32>
    %38 = arith.mulf %31, %37 : vector<4x128xf32>
    %cst_17 = arith.constant dense<0.000000e+00> : vector<4xf32>
    %39 = vector.multi_reduction <add>, %38, %cst_17 [1] : vector<4x128xf32> to vector<4xf32>
    %40 = vector.shape_cast %39 : vector<4xf32> to vector<4x1xf32>
    %41 = tpu.reciprocal %40 : vector<4x1xf32> -> vector<4x1xf32>
    %cst_18 = arith.constant dense<0.000000e+00> : vector<4x16xf32>
    %42 = tpu.matmul %38, %1, %cst_18 {dimension_numbers = #tpu.dot_dimension_numbers<[1], [1], [0], [0], [0, 0, 1, 0], [], []>} : vector<4x128xf32>, vector<16x128xf32>, vector<4x16xf32> -> vector<4x16xf32>
    %43 = vector.broadcast %41 : vector<4x1xf32> to vector<4x16xf32>
    %44 = arith.mulf %42, %43 : vector<4x16xf32>
    %45 = arith.mulf %38, %38 : vector<4x128xf32>
    %cst_19 = arith.constant dense<0.000000e+00> : vector<4x16xf32>
    %46 = tpu.matmul %45, %2, %cst_19 {dimension_numbers = #tpu.dot_dimension_numbers<[1], [1], [0], [0], [0, 0, 1, 0], [], []>} : vector<4x128xf32>, vector<16x128xf32>, vector<4x16xf32> -> vector<4x16xf32>
    %cst_20 = arith.constant dense<0.000000e+00> : vector<4x16xf32>
    %47 = tpu.matmul %45, %1, %cst_20 {dimension_numbers = #tpu.dot_dimension_numbers<[1], [1], [0], [0], [0, 0, 1, 0], [], []>} : vector<4x128xf32>, vector<16x128xf32>, vector<4x16xf32> -> vector<4x16xf32>
    %cst_21 = arith.constant dense<0.000000e+00> : vector<4xf32>
    %48 = vector.multi_reduction <add>, %45, %cst_21 [1] : vector<4x128xf32> to vector<4xf32>
    %49 = vector.shape_cast %48 : vector<4xf32> to vector<4x1xf32>
    %cst_22 = arith.constant 2.000000e+00 : f32
    %50 = vector.broadcast %cst_22 : f32 to vector<4x16xf32>
    %51 = arith.mulf %50, %44 : vector<4x16xf32>
    %52 = arith.mulf %51, %47 : vector<4x16xf32>
    %53 = arith.subf %46, %52 : vector<4x16xf32>
    %54 = arith.mulf %44, %44 : vector<4x16xf32>
    %55 = vector.broadcast %49 : vector<4x1xf32> to vector<4x16xf32>
    %56 = arith.mulf %54, %55 : vector<4x16xf32>
    %57 = arith.addf %53, %56 : vector<4x16xf32>
    %58 = vector.broadcast %41 : vector<4x1xf32> to vector<4x16xf32>
    %59 = arith.mulf %57, %58 : vector<4x16xf32>
    %cst_23 = arith.constant 9.99999974E-5 : f32
    %60 = vector.broadcast %cst_23 : f32 to vector<4x16xf32>
    %61 = arith.maximumf %59, %60 : vector<4x16xf32>
    %c1_i32 = arith.constant 1 : i32
    %62 = tpu.reciprocal %61 : vector<4x16xf32> -> vector<4x16xf32>
    %63 = math.log %61 : vector<4x16xf32>
    %cst_24 = arith.constant dense<0.000000e+00> : vector<4xf32>
    %64 = vector.multi_reduction <add>, %63, %cst_24 [1] : vector<4x16xf32> to vector<4xf32>
    %65 = vector.shape_cast %64 : vector<4xf32> to vector<4x1xf32>
    %cst_25 = arith.constant dense<0.000000e+00> : vector<4x128xf32>
    %66 = tpu.matmul %62, %2, %cst_25 {dimension_numbers = #tpu.dot_dimension_numbers<[1], [0], [0], [1], [0, 0, 1, 1], [], []>} : vector<4x16xf32>, vector<16x128xf32>, vector<4x128xf32> -> vector<4x128xf32>
    %67 = arith.mulf %44, %62 : vector<4x16xf32>
    %cst_26 = arith.constant dense<0.000000e+00> : vector<4x128xf32>
    %68 = tpu.matmul %67, %1, %cst_26 {dimension_numbers = #tpu.dot_dimension_numbers<[1], [0], [0], [1], [0, 0, 1, 1], [], []>} : vector<4x16xf32>, vector<16x128xf32>, vector<4x128xf32> -> vector<4x128xf32>
    %cst_27 = arith.constant 2.000000e+00 : f32
    %69 = vector.broadcast %cst_27 : f32 to vector<4x128xf32>
    %70 = arith.mulf %69, %68 : vector<4x128xf32>
    %71 = arith.subf %66, %70 : vector<4x128xf32>
    %72 = arith.mulf %44, %44 : vector<4x16xf32>
    %73 = arith.mulf %72, %62 : vector<4x16xf32>
    %cst_28 = arith.constant dense<0.000000e+00> : vector<4xf32>
    %74 = vector.multi_reduction <add>, %73, %cst_28 [1] : vector<4x16xf32> to vector<4xf32>
    %75 = vector.shape_cast %74 : vector<4xf32> to vector<4x1xf32>
    %76 = vector.broadcast %75 : vector<4x1xf32> to vector<4x128xf32>
    %77 = arith.addf %71, %76 : vector<4x128xf32>
    %cst_29 = arith.constant 29.4060326 : f32
    %78 = vector.broadcast %cst_29 : f32 to vector<4x1xf32>
    %79 = arith.addf %78, %65 : vector<4x1xf32>
    %80 = vector.broadcast %79 : vector<4x1xf32> to vector<4x128xf32>
    %81 = arith.addf %80, %77 : vector<4x128xf32>
    %cst_30 = arith.constant -5.000000e-01 : f32
    %82 = vector.broadcast %cst_30 : f32 to vector<4x128xf32>
    %83 = arith.mulf %82, %81 : vector<4x128xf32>
    %84 = math.exp %83 : vector<4x128xf32>
    %cst_31 = arith.constant 9.99999993E-9 : f32
    %85 = vector.broadcast %cst_31 : f32 to vector<4x128xf32>
    %86 = arith.addf %84, %85 : vector<4x128xf32>
    %cst_32 = arith.constant dense<0.000000e+00> : vector<128xf32>
    %87 = vector.multi_reduction <add>, %86, %cst_32 [0] : vector<4x128xf32> to vector<128xf32>
    %88 = vector.shape_cast %87 : vector<128xf32> to vector<1x128xf32>
    %cst_33 = arith.constant 9.99999996E-13 : f32
    %89 = vector.broadcast %cst_33 : f32 to vector<1x128xf32>
    %90 = arith.maximumf %88, %89 : vector<1x128xf32>
    %91 = tpu.reciprocal %90 : vector<1x128xf32> -> vector<1x128xf32>
    %92 = vector.broadcast %91 : vector<1x128xf32> to vector<4x128xf32>
    %93 = arith.mulf %86, %92 : vector<4x128xf32>
    %cst_34 = arith.constant dense<0.000000e+00> : vector<4xf32>
    %94 = vector.multi_reduction <add>, %93, %cst_34 [1] : vector<4x128xf32> to vector<4xf32>
    %95 = vector.shape_cast %94 : vector<4xf32> to vector<4x1xf32>
    %96 = tpu.reciprocal %95 : vector<4x1xf32> -> vector<4x1xf32>
    %cst_35 = arith.constant dense<0.000000e+00> : vector<4x16xf32>
    %97 = tpu.matmul %93, %1, %cst_35 {dimension_numbers = #tpu.dot_dimension_numbers<[1], [1], [0], [0], [0, 0, 1, 0], [], []>} : vector<4x128xf32>, vector<16x128xf32>, vector<4x16xf32> -> vector<4x16xf32>
    %98 = vector.broadcast %96 : vector<4x1xf32> to vector<4x16xf32>
    %99 = arith.mulf %97, %98 : vector<4x16xf32>
    %100 = arith.mulf %93, %93 : vector<4x128xf32>
    %cst_36 = arith.constant dense<0.000000e+00> : vector<4x16xf32>
    %101 = tpu.matmul %100, %2, %cst_36 {dimension_numbers = #tpu.dot_dimension_numbers<[1], [1], [0], [0], [0, 0, 1, 0], [], []>} : vector<4x128xf32>, vector<16x128xf32>, vector<4x16xf32> -> vector<4x16xf32>
    %cst_37 = arith.constant dense<0.000000e+00> : vector<4x16xf32>
    %102 = tpu.matmul %100, %1, %cst_37 {dimension_numbers = #tpu.dot_dimension_numbers<[1], [1], [0], [0], [0, 0, 1, 0], [], []>} : vector<4x128xf32>, vector<16x128xf32>, vector<4x16xf32> -> vector<4x16xf32>
    %cst_38 = arith.constant dense<0.000000e+00> : vector<4xf32>
    %103 = vector.multi_reduction <add>, %100, %cst_38 [1] : vector<4x128xf32> to vector<4xf32>
    %104 = vector.shape_cast %103 : vector<4xf32> to vector<4x1xf32>
    %cst_39 = arith.constant 2.000000e+00 : f32
    %105 = vector.broadcast %cst_39 : f32 to vector<4x16xf32>
    %106 = arith.mulf %105, %99 : vector<4x16xf32>
    %107 = arith.mulf %106, %102 : vector<4x16xf32>
    %108 = arith.subf %101, %107 : vector<4x16xf32>
    %109 = arith.mulf %99, %99 : vector<4x16xf32>
    %110 = vector.broadcast %104 : vector<4x1xf32> to vector<4x16xf32>
    %111 = arith.mulf %109, %110 : vector<4x16xf32>
    %112 = arith.addf %108, %111 : vector<4x16xf32>
    %113 = vector.broadcast %96 : vector<4x1xf32> to vector<4x16xf32>
    %114 = arith.mulf %112, %113 : vector<4x16xf32>
    %cst_40 = arith.constant 9.99999974E-5 : f32
    %115 = vector.broadcast %cst_40 : f32 to vector<4x16xf32>
    %116 = arith.maximumf %114, %115 : vector<4x16xf32>
    %c2_i32 = arith.constant 2 : i32
    %117 = tpu.reciprocal %116 : vector<4x16xf32> -> vector<4x16xf32>
    %118 = math.log %116 : vector<4x16xf32>
    %cst_41 = arith.constant dense<0.000000e+00> : vector<4xf32>
    %119 = vector.multi_reduction <add>, %118, %cst_41 [1] : vector<4x16xf32> to vector<4xf32>
    %120 = vector.shape_cast %119 : vector<4xf32> to vector<4x1xf32>
    %cst_42 = arith.constant dense<0.000000e+00> : vector<4x128xf32>
    %121 = tpu.matmul %117, %2, %cst_42 {dimension_numbers = #tpu.dot_dimension_numbers<[1], [0], [0], [1], [0, 0, 1, 1], [], []>} : vector<4x16xf32>, vector<16x128xf32>, vector<4x128xf32> -> vector<4x128xf32>
    %122 = arith.mulf %99, %117 : vector<4x16xf32>
    %cst_43 = arith.constant dense<0.000000e+00> : vector<4x128xf32>
    %123 = tpu.matmul %122, %1, %cst_43 {dimension_numbers = #tpu.dot_dimension_numbers<[1], [0], [0], [1], [0, 0, 1, 1], [], []>} : vector<4x16xf32>, vector<16x128xf32>, vector<4x128xf32> -> vector<4x128xf32>
    %cst_44 = arith.constant 2.000000e+00 : f32
    %124 = vector.broadcast %cst_44 : f32 to vector<4x128xf32>
    %125 = arith.mulf %124, %123 : vector<4x128xf32>
    %126 = arith.subf %121, %125 : vector<4x128xf32>
    %127 = arith.mulf %99, %99 : vector<4x16xf32>
    %128 = arith.mulf %127, %117 : vector<4x16xf32>
    %cst_45 = arith.constant dense<0.000000e+00> : vector<4xf32>
    %129 = vector.multi_reduction <add>, %128, %cst_45 [1] : vector<4x16xf32> to vector<4xf32>
    %130 = vector.shape_cast %129 : vector<4xf32> to vector<4x1xf32>
    %131 = vector.broadcast %130 : vector<4x1xf32> to vector<4x128xf32>
    %132 = arith.addf %126, %131 : vector<4x128xf32>
    %cst_46 = arith.constant 29.4060326 : f32
    %133 = vector.broadcast %cst_46 : f32 to vector<4x1xf32>
    %134 = arith.addf %133, %120 : vector<4x1xf32>
    %135 = vector.broadcast %134 : vector<4x1xf32> to vector<4x128xf32>
    %136 = arith.addf %135, %132 : vector<4x128xf32>
    %cst_47 = arith.constant -5.000000e-01 : f32
    %137 = vector.broadcast %cst_47 : f32 to vector<4x128xf32>
    %138 = arith.mulf %137, %136 : vector<4x128xf32>
    %139 = math.exp %138 : vector<4x128xf32>
    %cst_48 = arith.constant 9.99999993E-9 : f32
    %140 = vector.broadcast %cst_48 : f32 to vector<4x128xf32>
    %141 = arith.addf %139, %140 : vector<4x128xf32>
    %cst_49 = arith.constant dense<0.000000e+00> : vector<128xf32>
    %142 = vector.multi_reduction <add>, %141, %cst_49 [0] : vector<4x128xf32> to vector<128xf32>
    %143 = vector.shape_cast %142 : vector<128xf32> to vector<1x128xf32>
    %cst_50 = arith.constant 9.99999996E-13 : f32
    %144 = vector.broadcast %cst_50 : f32 to vector<1x128xf32>
    %145 = arith.maximumf %143, %144 : vector<1x128xf32>
    %146 = tpu.reciprocal %145 : vector<1x128xf32> -> vector<1x128xf32>
    %147 = vector.broadcast %146 : vector<1x128xf32> to vector<4x128xf32>
    %148 = arith.mulf %141, %147 : vector<4x128xf32>
    %cst_51 = arith.constant dense<0.000000e+00> : vector<4xf32>
    %149 = vector.multi_reduction <add>, %148, %cst_51 [1] : vector<4x128xf32> to vector<4xf32>
    %150 = vector.shape_cast %149 : vector<4xf32> to vector<4x1xf32>
    %151 = tpu.reciprocal %150 : vector<4x1xf32> -> vector<4x1xf32>
    %cst_52 = arith.constant dense<0.000000e+00> : vector<4x16xf32>
    %152 = tpu.matmul %148, %1, %cst_52 {dimension_numbers = #tpu.dot_dimension_numbers<[1], [1], [0], [0], [0, 0, 1, 0], [], []>} : vector<4x128xf32>, vector<16x128xf32>, vector<4x16xf32> -> vector<4x16xf32>
    %153 = vector.broadcast %151 : vector<4x1xf32> to vector<4x16xf32>
    %154 = arith.mulf %152, %153 : vector<4x16xf32>
    %155 = arith.mulf %148, %148 : vector<4x128xf32>
    %cst_53 = arith.constant dense<0.000000e+00> : vector<4x16xf32>
    %156 = tpu.matmul %155, %2, %cst_53 {dimension_numbers = #tpu.dot_dimension_numbers<[1], [1], [0], [0], [0, 0, 1, 0], [], []>} : vector<4x128xf32>, vector<16x128xf32>, vector<4x16xf32> -> vector<4x16xf32>
    %cst_54 = arith.constant dense<0.000000e+00> : vector<4x16xf32>
    %157 = tpu.matmul %155, %1, %cst_54 {dimension_numbers = #tpu.dot_dimension_numbers<[1], [1], [0], [0], [0, 0, 1, 0], [], []>} : vector<4x128xf32>, vector<16x128xf32>, vector<4x16xf32> -> vector<4x16xf32>
    %cst_55 = arith.constant dense<0.000000e+00> : vector<4xf32>
    %158 = vector.multi_reduction <add>, %155, %cst_55 [1] : vector<4x128xf32> to vector<4xf32>
    %159 = vector.shape_cast %158 : vector<4xf32> to vector<4x1xf32>
    %cst_56 = arith.constant 2.000000e+00 : f32
    %160 = vector.broadcast %cst_56 : f32 to vector<4x16xf32>
    %161 = arith.mulf %160, %154 : vector<4x16xf32>
    %162 = arith.mulf %161, %157 : vector<4x16xf32>
    %163 = arith.subf %156, %162 : vector<4x16xf32>
    %164 = arith.mulf %154, %154 : vector<4x16xf32>
    %165 = vector.broadcast %159 : vector<4x1xf32> to vector<4x16xf32>
    %166 = arith.mulf %164, %165 : vector<4x16xf32>
    %167 = arith.addf %163, %166 : vector<4x16xf32>
    %168 = vector.broadcast %151 : vector<4x1xf32> to vector<4x16xf32>
    %169 = arith.mulf %167, %168 : vector<4x16xf32>
    %cst_57 = arith.constant 9.99999974E-5 : f32
    %170 = vector.broadcast %cst_57 : f32 to vector<4x16xf32>
    %171 = arith.maximumf %169, %170 : vector<4x16xf32>
    %c3_i32 = arith.constant 3 : i32
    %172 = tpu.reciprocal %171 : vector<4x16xf32> -> vector<4x16xf32>
    %173 = math.log %171 : vector<4x16xf32>
    %cst_58 = arith.constant dense<0.000000e+00> : vector<4xf32>
    %174 = vector.multi_reduction <add>, %173, %cst_58 [1] : vector<4x16xf32> to vector<4xf32>
    %175 = vector.shape_cast %174 : vector<4xf32> to vector<4x1xf32>
    %cst_59 = arith.constant dense<0.000000e+00> : vector<4x128xf32>
    %176 = tpu.matmul %172, %2, %cst_59 {dimension_numbers = #tpu.dot_dimension_numbers<[1], [0], [0], [1], [0, 0, 1, 1], [], []>} : vector<4x16xf32>, vector<16x128xf32>, vector<4x128xf32> -> vector<4x128xf32>
    %177 = arith.mulf %154, %172 : vector<4x16xf32>
    %cst_60 = arith.constant dense<0.000000e+00> : vector<4x128xf32>
    %178 = tpu.matmul %177, %1, %cst_60 {dimension_numbers = #tpu.dot_dimension_numbers<[1], [0], [0], [1], [0, 0, 1, 1], [], []>} : vector<4x16xf32>, vector<16x128xf32>, vector<4x128xf32> -> vector<4x128xf32>
    %cst_61 = arith.constant 2.000000e+00 : f32
    %179 = vector.broadcast %cst_61 : f32 to vector<4x128xf32>
    %180 = arith.mulf %179, %178 : vector<4x128xf32>
    %181 = arith.subf %176, %180 : vector<4x128xf32>
    %182 = arith.mulf %154, %154 : vector<4x16xf32>
    %183 = arith.mulf %182, %172 : vector<4x16xf32>
    %cst_62 = arith.constant dense<0.000000e+00> : vector<4xf32>
    %184 = vector.multi_reduction <add>, %183, %cst_62 [1] : vector<4x16xf32> to vector<4xf32>
    %185 = vector.shape_cast %184 : vector<4xf32> to vector<4x1xf32>
    %186 = vector.broadcast %185 : vector<4x1xf32> to vector<4x128xf32>
    %187 = arith.addf %181, %186 : vector<4x128xf32>
    %cst_63 = arith.constant 29.4060326 : f32
    %188 = vector.broadcast %cst_63 : f32 to vector<4x1xf32>
    %189 = arith.addf %188, %175 : vector<4x1xf32>
    %190 = vector.broadcast %189 : vector<4x1xf32> to vector<4x128xf32>
    %191 = arith.addf %190, %187 : vector<4x128xf32>
    %cst_64 = arith.constant -5.000000e-01 : f32
    %192 = vector.broadcast %cst_64 : f32 to vector<4x128xf32>
    %193 = arith.mulf %192, %191 : vector<4x128xf32>
    %194 = math.exp %193 : vector<4x128xf32>
    %cst_65 = arith.constant 9.99999993E-9 : f32
    %195 = vector.broadcast %cst_65 : f32 to vector<4x128xf32>
    %196 = arith.addf %194, %195 : vector<4x128xf32>
    %cst_66 = arith.constant dense<0.000000e+00> : vector<128xf32>
    %197 = vector.multi_reduction <add>, %196, %cst_66 [0] : vector<4x128xf32> to vector<128xf32>
    %198 = vector.shape_cast %197 : vector<128xf32> to vector<1x128xf32>
    %cst_67 = arith.constant 9.99999996E-13 : f32
    %199 = vector.broadcast %cst_67 : f32 to vector<1x128xf32>
    %200 = arith.maximumf %198, %199 : vector<1x128xf32>
    %201 = tpu.reciprocal %200 : vector<1x128xf32> -> vector<1x128xf32>
    %202 = vector.broadcast %201 : vector<1x128xf32> to vector<4x128xf32>
    %203 = arith.mulf %196, %202 : vector<4x128xf32>
    %cst_68 = arith.constant dense<0.000000e+00> : vector<4xf32>
    %204 = vector.multi_reduction <add>, %203, %cst_68 [1] : vector<4x128xf32> to vector<4xf32>
    %205 = vector.shape_cast %204 : vector<4xf32> to vector<4x1xf32>
    %206 = tpu.reciprocal %205 : vector<4x1xf32> -> vector<4x1xf32>
    %cst_69 = arith.constant dense<0.000000e+00> : vector<4x16xf32>
    %207 = tpu.matmul %203, %1, %cst_69 {dimension_numbers = #tpu.dot_dimension_numbers<[1], [1], [0], [0], [0, 0, 1, 0], [], []>} : vector<4x128xf32>, vector<16x128xf32>, vector<4x16xf32> -> vector<4x16xf32>
    %208 = vector.broadcast %206 : vector<4x1xf32> to vector<4x16xf32>
    %209 = arith.mulf %207, %208 : vector<4x16xf32>
    %210 = arith.mulf %203, %203 : vector<4x128xf32>
    %cst_70 = arith.constant dense<0.000000e+00> : vector<4x16xf32>
    %211 = tpu.matmul %210, %2, %cst_70 {dimension_numbers = #tpu.dot_dimension_numbers<[1], [1], [0], [0], [0, 0, 1, 0], [], []>} : vector<4x128xf32>, vector<16x128xf32>, vector<4x16xf32> -> vector<4x16xf32>
    %cst_71 = arith.constant dense<0.000000e+00> : vector<4x16xf32>
    %212 = tpu.matmul %210, %1, %cst_71 {dimension_numbers = #tpu.dot_dimension_numbers<[1], [1], [0], [0], [0, 0, 1, 0], [], []>} : vector<4x128xf32>, vector<16x128xf32>, vector<4x16xf32> -> vector<4x16xf32>
    %cst_72 = arith.constant dense<0.000000e+00> : vector<4xf32>
    %213 = vector.multi_reduction <add>, %210, %cst_72 [1] : vector<4x128xf32> to vector<4xf32>
    %214 = vector.shape_cast %213 : vector<4xf32> to vector<4x1xf32>
    %cst_73 = arith.constant 2.000000e+00 : f32
    %215 = vector.broadcast %cst_73 : f32 to vector<4x16xf32>
    %216 = arith.mulf %215, %209 : vector<4x16xf32>
    %217 = arith.mulf %216, %212 : vector<4x16xf32>
    %218 = arith.subf %211, %217 : vector<4x16xf32>
    %219 = arith.mulf %209, %209 : vector<4x16xf32>
    %220 = vector.broadcast %214 : vector<4x1xf32> to vector<4x16xf32>
    %221 = arith.mulf %219, %220 : vector<4x16xf32>
    %222 = arith.addf %218, %221 : vector<4x16xf32>
    %223 = vector.broadcast %206 : vector<4x1xf32> to vector<4x16xf32>
    %224 = arith.mulf %222, %223 : vector<4x16xf32>
    %cst_74 = arith.constant 9.99999974E-5 : f32
    %225 = vector.broadcast %cst_74 : f32 to vector<4x16xf32>
    %226 = arith.maximumf %224, %225 : vector<4x16xf32>
    %227 = tpu.reciprocal %226 : vector<4x16xf32> -> vector<4x16xf32>
    %228 = math.log %226 : vector<4x16xf32>
    %cst_75 = arith.constant dense<0.000000e+00> : vector<4xf32>
    %229 = vector.multi_reduction <add>, %228, %cst_75 [1] : vector<4x16xf32> to vector<4xf32>
    %230 = vector.shape_cast %229 : vector<4xf32> to vector<4x1xf32>
    %cst_76 = arith.constant dense<0.000000e+00> : vector<4x128xf32>
    %231 = tpu.matmul %227, %2, %cst_76 {dimension_numbers = #tpu.dot_dimension_numbers<[1], [0], [0], [1], [0, 0, 1, 1], [], []>} : vector<4x16xf32>, vector<16x128xf32>, vector<4x128xf32> -> vector<4x128xf32>
    %232 = arith.mulf %209, %227 : vector<4x16xf32>
    %cst_77 = arith.constant dense<0.000000e+00> : vector<4x128xf32>
    %233 = tpu.matmul %232, %1, %cst_77 {dimension_numbers = #tpu.dot_dimension_numbers<[1], [0], [0], [1], [0, 0, 1, 1], [], []>} : vector<4x16xf32>, vector<16x128xf32>, vector<4x128xf32> -> vector<4x128xf32>
    %cst_78 = arith.constant 2.000000e+00 : f32
    %234 = vector.broadcast %cst_78 : f32 to vector<4x128xf32>
    %235 = arith.mulf %234, %233 : vector<4x128xf32>
    %236 = arith.subf %231, %235 : vector<4x128xf32>
    %237 = arith.mulf %209, %209 : vector<4x16xf32>
    %238 = arith.mulf %237, %227 : vector<4x16xf32>
    %cst_79 = arith.constant dense<0.000000e+00> : vector<4xf32>
    %239 = vector.multi_reduction <add>, %238, %cst_79 [1] : vector<4x16xf32> to vector<4xf32>
    %240 = vector.shape_cast %239 : vector<4xf32> to vector<4x1xf32>
    %241 = vector.broadcast %240 : vector<4x1xf32> to vector<4x128xf32>
    %242 = arith.addf %236, %241 : vector<4x128xf32>
    %cst_80 = arith.constant 29.4060326 : f32
    %243 = vector.broadcast %cst_80 : f32 to vector<4x1xf32>
    %244 = arith.addf %243, %230 : vector<4x1xf32>
    %245 = vector.broadcast %244 : vector<4x1xf32> to vector<4x128xf32>
    %246 = arith.addf %245, %242 : vector<4x128xf32>
    %cst_81 = arith.constant -5.000000e-01 : f32
    %247 = vector.broadcast %cst_81 : f32 to vector<4x128xf32>
    %248 = arith.mulf %247, %246 : vector<4x128xf32>
    %249 = math.exp %248 : vector<4x128xf32>
    %cst_82 = arith.constant 9.99999993E-9 : f32
    %250 = vector.broadcast %cst_82 : f32 to vector<4x128xf32>
    %251 = arith.addf %249, %250 : vector<4x128xf32>
    %cst_83 = arith.constant dense<0.000000e+00> : vector<128xf32>
    %252 = vector.multi_reduction <add>, %251, %cst_83 [0] : vector<4x128xf32> to vector<128xf32>
    %253 = vector.shape_cast %252 : vector<128xf32> to vector<1x128xf32>
    %cst_84 = arith.constant 9.99999996E-13 : f32
    %254 = vector.broadcast %cst_84 : f32 to vector<1x128xf32>
    %255 = arith.maximumf %253, %254 : vector<1x128xf32>
    %256 = tpu.reciprocal %255 : vector<1x128xf32> -> vector<1x128xf32>
    %257 = vector.broadcast %256 : vector<1x128xf32> to vector<4x128xf32>
    %258 = arith.mulf %251, %257 : vector<4x128xf32>
    %cst_85 = arith.constant dense<0.000000e+00> : vector<4xf32>
    %259 = vector.multi_reduction <add>, %258, %cst_85 [1] : vector<4x128xf32> to vector<4xf32>
    %260 = vector.shape_cast %259 : vector<4xf32> to vector<4x1xf32>
    %261 = tpu.reciprocal %260 : vector<4x1xf32> -> vector<4x1xf32>
    %cst_86 = arith.constant dense<0.000000e+00> : vector<4x16xf32>
    %262 = tpu.matmul %258, %1, %cst_86 {dimension_numbers = #tpu.dot_dimension_numbers<[1], [1], [0], [0], [0, 0, 1, 0], [], []>} : vector<4x128xf32>, vector<16x128xf32>, vector<4x16xf32> -> vector<4x16xf32>
    %263 = vector.broadcast %261 : vector<4x1xf32> to vector<4x16xf32>
    %264 = arith.mulf %262, %263 : vector<4x16xf32>
    %265 = arith.mulf %258, %258 : vector<4x128xf32>
    %cst_87 = arith.constant dense<0.000000e+00> : vector<4x16xf32>
    %266 = tpu.matmul %265, %2, %cst_87 {dimension_numbers = #tpu.dot_dimension_numbers<[1], [1], [0], [0], [0, 0, 1, 0], [], []>} : vector<4x128xf32>, vector<16x128xf32>, vector<4x16xf32> -> vector<4x16xf32>
    %cst_88 = arith.constant dense<0.000000e+00> : vector<4x16xf32>
    %267 = tpu.matmul %265, %1, %cst_88 {dimension_numbers = #tpu.dot_dimension_numbers<[1], [1], [0], [0], [0, 0, 1, 0], [], []>} : vector<4x128xf32>, vector<16x128xf32>, vector<4x16xf32> -> vector<4x16xf32>
    %cst_89 = arith.constant dense<0.000000e+00> : vector<4xf32>
    %268 = vector.multi_reduction <add>, %265, %cst_89 [1] : vector<4x128xf32> to vector<4xf32>
    %269 = vector.shape_cast %268 : vector<4xf32> to vector<4x1xf32>
    %cst_90 = arith.constant 2.000000e+00 : f32
    %270 = vector.broadcast %cst_90 : f32 to vector<4x16xf32>
    %271 = arith.mulf %270, %264 : vector<4x16xf32>
    %272 = arith.mulf %271, %267 : vector<4x16xf32>
    %273 = arith.subf %266, %272 : vector<4x16xf32>
    %274 = arith.mulf %264, %264 : vector<4x16xf32>
    %275 = vector.broadcast %269 : vector<4x1xf32> to vector<4x16xf32>
    %276 = arith.mulf %274, %275 : vector<4x16xf32>
    %277 = arith.addf %273, %276 : vector<4x16xf32>
    %278 = vector.broadcast %261 : vector<4x1xf32> to vector<4x16xf32>
    %279 = arith.mulf %277, %278 : vector<4x16xf32>
    %cst_91 = arith.constant 9.99999974E-5 : f32
    %280 = vector.broadcast %cst_91 : f32 to vector<4x16xf32>
    %281 = arith.maximumf %279, %280 : vector<4x16xf32>
    %c0_92 = arith.constant 0 : index
    %c0_93 = arith.constant 0 : index
    %c0_94 = arith.constant 0 : index
    %282 = vector.load %arg4[%c0_92, %c0_93, %c0_94] : memref<1x4x128xf32, #tpu.memory_space<vmem>>, vector<1x4x128xf32>
    %283 = vector.shape_cast %282 : vector<1x4x128xf32> to vector<4x128xf32>
    %284 = vector.shape_cast %258 : vector<4x128xf32> to vector<1x4x128xf32>
    tpu.vector_store %arg4[%c0_92, %c0_93, %c0_94], %284 {strides = array<i32>} : memref<1x4x128xf32, #tpu.memory_space<vmem>>, vector<1x4x128xf32>,
    %c0_95 = arith.constant 0 : index
    %c0_96 = arith.constant 0 : index
    %c0_97 = arith.constant 0 : index
    %285 = vector.load %arg5[%c0_95, %c0_96, %c0_97] : memref<1x4x128xf32, #tpu.memory_space<vmem>>, vector<1x4x128xf32>
    %286 = vector.shape_cast %285 : vector<1x4x128xf32> to vector<4x128xf32>
    %287 = vector.shape_cast %248 : vector<4x128xf32> to vector<1x4x128xf32>
    tpu.vector_store %arg5[%c0_95, %c0_96, %c0_97], %287 {strides = array<i32>} : memref<1x4x128xf32, #tpu.memory_space<vmem>>, vector<1x4x128xf32>,
    %c0_98 = arith.constant 0 : index
    %c0_99 = arith.constant 0 : index
    %c0_100 = arith.constant 0 : index
    %288 = vector.load %arg6[%c0_98, %c0_99, %c0_100] : memref<1x4x16xf32, #tpu.memory_space<vmem>>, vector<1x4x16xf32>
    %289 = vector.shape_cast %288 : vector<1x4x16xf32> to vector<4x16xf32>
    %290 = vector.shape_cast %264 : vector<4x16xf32> to vector<1x4x16xf32>
    tpu.vector_store %arg6[%c0_98, %c0_99, %c0_100], %290 {strides = array<i32>} : memref<1x4x16xf32, #tpu.memory_space<vmem>>, vector<1x4x16xf32>,
    %c0_101 = arith.constant 0 : index
    %c0_102 = arith.constant 0 : index
    %c0_103 = arith.constant 0 : index
    %291 = vector.load %arg7[%c0_101, %c0_102, %c0_103] : memref<1x4x16xf32, #tpu.memory_space<vmem>>, vector<1x4x16xf32>
    %292 = vector.shape_cast %291 : vector<1x4x16xf32> to vector<4x16xf32>
    %293 = vector.shape_cast %281 : vector<4x16xf32> to vector<1x4x16xf32>
    tpu.vector_store %arg7[%c0_101, %c0_102, %c0_103], %293 {strides = array<i32>} : memref<1x4x16xf32, #tpu.memory_space<vmem>>, vector<1x4x16xf32>,
    %c0_104 = arith.constant 0 : index
    %c0_105 = arith.constant 0 : index
    %c0_106 = arith.constant 0 : index
    %294 = vector.load %arg8[%c0_104, %c0_105, %c0_106] : memref<1x4x1xf32, #tpu.memory_space<vmem>>, vector<1x4x1xf32>
    %295 = vector.shape_cast %294 : vector<1x4x1xf32> to vector<4x1xf32>
    %296 = vector.shape_cast %260 : vector<4x1xf32> to vector<1x4x1xf32>
    tpu.vector_store %arg8[%c0_104, %c0_105, %c0_106], %296 {strides = array<i32>} : memref<1x4x1xf32, #tpu.memory_space<vmem>>, vector<1x4x1xf32>,
    return
  }
  func.func @transform_0(%arg0: i32) -> (i32, i32, i32) {
    %c0_i32 = arith.constant 0 : i32
    %c0_i32_0 = arith.constant 0 : i32
    %c0_i32_1 = arith.constant 0 : i32
    return %arg0, %c0_i32, %c0_i32_0 : i32, i32, i32
  }
  func.func @transform_1(%arg0: i32) -> (i32, i32, i32) {
    %c0_i32 = arith.constant 0 : i32
    %c0_i32_0 = arith.constant 0 : i32
    %c0_i32_1 = arith.constant 0 : i32
    return %arg0, %c0_i32, %c0_i32_0 : i32, i32, i32
  }
  func.func @transform_2(%arg0: i32) -> (i32, i32, i32) {
    %c0_i32 = arith.constant 0 : i32
    %c0_i32_0 = arith.constant 0 : i32
    %c0_i32_1 = arith.constant 0 : i32
    return %arg0, %c0_i32, %c0_i32_0 : i32, i32, i32
  }
  func.func @transform_3(%arg0: i32) -> (i32, i32, i32) {
    %c0_i32 = arith.constant 0 : i32
    %c0_i32_0 = arith.constant 0 : i32
    %c0_i32_1 = arith.constant 0 : i32
    return %arg0, %c0_i32, %c0_i32_0 : i32, i32, i32
  }
  func.func @transform_4(%arg0: i32) -> (i32, i32, i32) {
    %c0_i32 = arith.constant 0 : i32
    %c0_i32_0 = arith.constant 0 : i32
    %c0_i32_1 = arith.constant 0 : i32
    return %arg0, %c0_i32, %c0_i32_0 : i32, i32, i32
  }
  func.func @transform_5(%arg0: i32) -> (i32, i32, i32) {
    %c0_i32 = arith.constant 0 : i32
    %c0_i32_0 = arith.constant 0 : i32
    %c0_i32_1 = arith.constant 0 : i32
    return %arg0, %c0_i32, %c0_i32_0 : i32, i32, i32
  }
  func.func @transform_6(%arg0: i32) -> (i32, i32, i32) {
    %c0_i32 = arith.constant 0 : i32
    %c0_i32_0 = arith.constant 0 : i32
    %c0_i32_1 = arith.constant 0 : i32
    return %arg0, %c0_i32, %c0_i32_0 : i32, i32, i32
  }
  func.func @transform_7(%arg0: i32) -> (i32, i32, i32) {
    %c0_i32 = arith.constant 0 : i32
    %c0_i32_0 = arith.constant 0 : i32
    %c0_i32_1 = arith.constant 0 : i32
    return %arg0, %c0_i32, %c0_i32_0 : i32, i32, i32
  }
}

</mosaic_0001>

<llo_original>
// kernel: tpu_custom_call.1
$region0: #{tpu_custom_call.1}
  #allocation0 [shape = 'u32[]', space=smem, size = 0x4, offset = 0x4, fixed_abs, tag = 'smem constant byte address 0x4 - core index']
  #allocation1 [shape = 'u32[72,128]{1,0:T(1,128)}', space=vmem, size = 0x9000, scoped, tag = 'internal scratch']
  %s0 = inlined_call_operand.hbm [shape: f32[2,16,128], index: 0, kind: input, shape index: {}]
  %s1 = inlined_call_operand.hbm [shape: f32[2,4,16], index: 1, kind: input, shape index: {}]
  %s2 = inlined_call_operand.hbm [shape: f32[2,4,16], index: 2, kind: input, shape index: {}]
  %s3 = inlined_call_operand.hbm [shape: f32[2,4,128], index: 3, kind: output, shape index: {0}]
  %s4 = inlined_call_operand.hbm [shape: f32[2,4,128], index: 4, kind: output, shape index: {1}]
  %s5 = inlined_call_operand.hbm [shape: f32[2,4,16], index: 5, kind: output, shape index: {2}]
  %s6 = inlined_call_operand.hbm [shape: f32[2,4,16], index: 6, kind: output, shape index: {3}]
  %s7 = inlined_call_operand.vmem [shape: f32[2,4,1], index: 7, kind: output, shape index: {4}]
  %8 = xla_tuple %s3, %s4, %s5, %s6, %s7
  %s9 = sld [smem:[#allocation0]]
  $region89: #{tpu_custom_call.1} parent=0
    _
  %s11 = ssub.s32 1, %s9
  %s12 = scalar_select 0, %s11, %s9
  $region1: #{tpu_custom_call.1} parent=0
    #allocation2 [shape = 'u8[16384]{0}', space=vmem, size = 0x4000, scoped, tag = 'input window, operand 0']
    #allocation3 [shape = 's32[2]{0}', space=sflag, size = 0x8, scoped, tag = 'scoped memory for tpu_custom_call.1']
    #allocation4 [shape = 's32[2]{0}', space=sflag, size = 0x8, scoped, tag = 'scoped memory for tpu_custom_call.1']
    #allocation5 [shape = 'u8[4096]{0}', space=vmem, size = 0x1000, scoped, tag = 'input window, operand 1']
    #allocation6 [shape = 's32[2]{0}', space=sflag, size = 0x8, scoped, tag = 'scoped memory for tpu_custom_call.1']
    #allocation7 [shape = 'u8[4096]{0}', space=vmem, size = 0x1000, scoped, tag = 'input window, operand 2']
    #allocation8 [shape = 'u8[4096]{0}', space=vmem, size = 0x1000, scoped, tag = 'output window, operand 0']
    #allocation9 [shape = 'u8[4096]{0}', space=vmem, size = 0x1000, scoped, tag = 'output window, operand 1']
    #allocation10 [shape = 's32[2]{0}', space=sflag, size = 0x8, scoped, tag = 'scoped memory for tpu_custom_call.1']
    #allocation11 [shape = 'u8[4096]{0}', space=vmem, size = 0x1000, scoped, tag = 'output window, operand 2']
    #allocation12 [shape = 'u8[4096]{0}', space=vmem, size = 0x1000, scoped, tag = 'output window, operand 3']
    #allocation13 [shape = 's32[2]{0}', space=sflag, size = 0x8, scoped, tag = 'scoped memory for tpu_custom_call.1']
    %13 = vsyncpa [#allocation3], 0
    %s14 = scalar_lea.sflag [#allocation3], 1
    %15 = vsyncpa %s14, 0
    %16 = vsyncpa [#allocation6], 0
    %s17 = scalar_lea.sflag [#allocation6], 1
    %18 = vsyncpa %s17, 0
    %19 = vsyncpa [#allocation4], 0
    %s20 = scalar_lea.sflag [#allocation4], 1
    %21 = vsyncpa %s20, 0
    %22 = vsyncpa [#allocation10], 0
    %s23 = scalar_lea.sflag [#allocation10], 1
    %24 = vsyncpa %s23, 0
    %25 = vsyncpa [#allocation13], 0
    %s26 = scalar_lea.sflag [#allocation13], 1
    %27 = vsyncpa %s26, 0
    loop: start=0, step=1, limit=4
    $region2: #{tpu_custom_call.1} parent=1 // loop_pre_header
      _
    $region3: #{tpu_custom_call.1} parent=1 // loop_header
      %s29 = sphi 0, %s33
      %p30 = scmp.ge.s32.totalorder %s29, 4
      %s39 = sphi 0, %s41
      %s42 = sphi 0, %s39
      %s43 = sphi 0, %s42
      %s59 = sphi 0, %s43
      %s65 = sphi 0, %s67
      %s68 = sphi 0, %s65
      %s69 = sphi 0, %s68
      %s85 = sphi 0, %s69
      %s91 = sphi 0, %s93
      %s94 = sphi 0, %s91
      %s95 = sphi 0, %s94
      %s111 = sphi 0, %s95
      %s117 = sphi 0, %s119
      %s120 = sphi 0, %s117
      %s121 = sphi 0, %s120
      %s137 = sphi 0, %s121
      %s143 = sphi 0, %s145
      %s146 = sphi 0, %s143
      %s147 = sphi 0, %s146
      %s163 = sphi 0, %s147
      %s169 = sphi 0, %s171
      %s172 = sphi 0, %s169
      %s173 = sphi 0, %s172
      %s189 = sphi 0, %s173
      %s195 = sphi 0, %s197
      %s198 = sphi 0, %s195
      %s199 = sphi 0, %s198
      %s215 = sphi 0, %s199
      %s221 = sphi 0, %s223
      %s224 = sphi 0, %s221
      %s225 = sphi 0, %s224
      %s241 = sphi 0, %s225
    $region4: #{tpu_custom_call.1} parent=1 // loop_header_branch
      %32 = sbr.rel (%p30) target = $region8
    $region5: #{tpu_custom_call.1} parent=1 // loop_body
      %s34 = ssub.s32 %s29, 1
      %s35 = ssub.s32 %s29, 2
      %s36 = sadd.s32 %s29, 1
      %s37 = ssub.s32 %s29, %s36
      %p38 = scmp.eq.s32.totalorder %s37, 0
      %s40 = sadd.s32 %s39, 1
      %s41 = scalar_select %p38, %s39, %s40
      %p44 = pneg %p38
      %p45 = scmp.eq.s32.totalorder %s29, 1
      %p46 = por %p44, %p45
      %p47 = scmp.ne.s32.totalorder %s39, %s42
      %p48 = scmp.eq.s32.totalorder %s29, 0
      %p49 = por %p47, %p48
      %p50 = scmp.ne.s32.totalorder %s39, %s42
      %p51 = scmp.eq.s32.totalorder %s34, 1
      %p52 = por %p50, %p51
      %p53 = scmp.ne.s32.totalorder %s42, %s43
      %p54 = scmp.eq.s32.totalorder %s34, 0
      %p55 = por %p53, %p54
      %p56 = scmp.ne.s32.totalorder %s42, %s43
      %p57 = scmp.eq.s32.totalorder %s35, 1
      %p58 = por %p56, %p57
      %p60 = scmp.ne.s32.totalorder %s43, %s59
      %p61 = scmp.eq.s32.totalorder %s35, 0
      %p62 = por %p60, %p61
      %s63 = ssub.s32 %s29, %s36
      %p64 = scmp.eq.s32.totalorder %s63, 0
      %s66 = sadd.s32 %s65, 1
      %s67 = scalar_select %p64, %s65, %s66
      %p70 = pneg %p64
      %p71 = scmp.eq.s32.totalorder %s29, 1
      %p72 = por %p70, %p71
      %p73 = scmp.ne.s32.totalorder %s65, %s68
      %p74 = scmp.eq.s32.totalorder %s29, 0
      %p75 = por %p73, %p74
      %p76 = scmp.ne.s32.totalorder %s65, %s68
      %p77 = scmp.eq.s32.totalorder %s34, 1
      %p78 = por %p76, %p77
      %p79 = scmp.ne.s32.totalorder %s68, %s69
      %p80 = scmp.eq.s32.totalorder %s34, 0
      %p81 = por %p79, %p80
      %p82 = scmp.ne.s32.totalorder %s68, %s69
      %p83 = scmp.eq.s32.totalorder %s35, 1
      %p84 = por %p82, %p83
      %p86 = scmp.ne.s32.totalorder %s69, %s85
      %p87 = scmp.eq.s32.totalorder %s35, 0
      %p88 = por %p86, %p87
      %s89 = ssub.s32 %s29, %s36
      %p90 = scmp.eq.s32.totalorder %s89, 0
      %s92 = sadd.s32 %s91, 1
      %s93 = scalar_select %p90, %s91, %s92
      %p96 = pneg %p90
      %p97 = scmp.eq.s32.totalorder %s29, 1
      %p98 = por %p96, %p97
      %p99 = scmp.ne.s32.totalorder %s91, %s94
      %p100 = scmp.eq.s32.totalorder %s29, 0
      %p101 = por %p99, %p100
      %p102 = scmp.ne.s32.totalorder %s91, %s94
      %p103 = scmp.eq.s32.totalorder %s34, 1
      %p104 = por %p102, %p103
      %p105 = scmp.ne.s32.totalorder %s94, %s95
      %p106 = scmp.eq.s32.totalorder %s34, 0
      %p107 = por %p105, %p106
      %p108 = scmp.ne.s32.totalorder %s94, %s95
      %p109 = scmp.eq.s32.totalorder %s35, 1
      %p110 = por %p108, %p109
      %p112 = scmp.ne.s32.totalorder %s95, %s111
      %p113 = scmp.eq.s32.totalorder %s35, 0
      %p114 = por %p112, %p113
      %s115 = ssub.s32 %s29, %s36
      %p116 = scmp.eq.s32.totalorder %s115, 0
      %s118 = sadd.s32 %s117, 1
      %s119 = scalar_select %p116, %s117, %s118
      %p122 = pneg %p116
      %p123 = scmp.eq.s32.totalorder %s29, 1
      %p124 = por %p122, %p123
      %p125 = scmp.ne.s32.totalorder %s117, %s120
      %p126 = scmp.eq.s32.totalorder %s29, 0
      %p127 = por %p125, %p126
      %p128 = scmp.ne.s32.totalorder %s117, %s120
      %p129 = scmp.eq.s32.totalorder %s34, 1
      %p130 = por %p128, %p129
      %p131 = scmp.ne.s32.totalorder %s120, %s121
      %p132 = scmp.eq.s32.totalorder %s34, 0
      %p133 = por %p131, %p132
      %p134 = scmp.ne.s32.totalorder %s120, %s121
      %p135 = scmp.eq.s32.totalorder %s35, 1
      %p136 = por %p134, %p135
      %p138 = scmp.ne.s32.totalorder %s121, %s137
      %p139 = scmp.eq.s32.totalorder %s35, 0
      %p140 = por %p138, %p139
      %s141 = ssub.s32 %s29, %s36
      %p142 = scmp.eq.s32.totalorder %s141, 0
      %s144 = sadd.s32 %s143, 1
      %s145 = scalar_select %p142, %s143, %s144
      %p148 = pneg %p142
      %p149 = scmp.eq.s32.totalorder %s29, 1
      %p150 = por %p148, %p149
      %p151 = scmp.ne.s32.totalorder %s143, %s146
      %p152 = scmp.eq.s32.totalorder %s29, 0
      %p153 = por %p151, %p152
      %p154 = scmp.ne.s32.totalorder %s143, %s146
      %p155 = scmp.eq.s32.totalorder %s34, 1
      %p156 = por %p154, %p155
      %p157 = scmp.ne.s32.totalorder %s146, %s147
      %p158 = scmp.eq.s32.totalorder %s34, 0
      %p159 = por %p157, %p158
      %p160 = scmp.ne.s32.totalorder %s146, %s147
      %p161 = scmp.eq.s32.totalorder %s35, 1
      %p162 = por %p160, %p161
      %p164 = scmp.ne.s32.totalorder %s147, %s163
      %p165 = scmp.eq.s32.totalorder %s35, 0
      %p166 = por %p164, %p165
      %s167 = ssub.s32 %s29, %s36
      %p168 = scmp.eq.s32.totalorder %s167, 0
      %s170 = sadd.s32 %s169, 1
      %s171 = scalar_select %p168, %s169, %s170
      %p174 = pneg %p168
      %p175 = scmp.eq.s32.totalorder %s29, 1
      %p176 = por %p174, %p175
      %p177 = scmp.ne.s32.totalorder %s169, %s172
      %p178 = scmp.eq.s32.totalorder %s29, 0
      %p179 = por %p177, %p178
      %p180 = scmp.ne.s32.totalorder %s169, %s172
      %p181 = scmp.eq.s32.totalorder %s34, 1
      %p182 = por %p180, %p181
      %p183 = scmp.ne.s32.totalorder %s172, %s173
      %p184 = scmp.eq.s32.totalorder %s34, 0
      %p185 = por %p183, %p184
      %p186 = scmp.ne.s32.totalorder %s172, %s173
      %p187 = scmp.eq.s32.totalorder %s35, 1
      %p188 = por %p186, %p187
      %p190 = scmp.ne.s32.totalorder %s173, %s189
      %p191 = scmp.eq.s32.totalorder %s35, 0
      %p192 = por %p190, %p191
      %s193 = ssub.s32 %s29, %s36
      %p194 = scmp.eq.s32.totalorder %s193, 0
      %s196 = sadd.s32 %s195, 1
      %s197 = scalar_select %p194, %s195, %s196
      %p200 = pneg %p194
      %p201 = scmp.eq.s32.totalorder %s29, 1
      %p202 = por %p200, %p201
      %p203 = scmp.ne.s32.totalorder %s195, %s198
      %p204 = scmp.eq.s32.totalorder %s29, 0
      %p205 = por %p203, %p204
      %p206 = scmp.ne.s32.totalorder %s195, %s198
      %p207 = scmp.eq.s32.totalorder %s34, 1
      %p208 = por %p206, %p207
      %p209 = scmp.ne.s32.totalorder %s198, %s199
      %p210 = scmp.eq.s32.totalorder %s34, 0
      %p211 = por %p209, %p210
      %p212 = scmp.ne.s32.totalorder %s198, %s199
      %p213 = scmp.eq.s32.totalorder %s35, 1
      %p214 = por %p212, %p213
      %p216 = scmp.ne.s32.totalorder %s199, %s215
      %p217 = scmp.eq.s32.totalorder %s35, 0
      %p218 = por %p216, %p217
      %s219 = ssub.s32 %s29, %s36
      %p220 = scmp.eq.s32.totalorder %s219, 0
      %s222 = sadd.s32 %s221, 1
      %s223 = scalar_select %p220, %s221, %s222
      %p226 = pneg %p220
      %p227 = scmp.eq.s32.totalorder %s29, 1
      %p228 = por %p226, %p227
      %p229 = scmp.ne.s32.totalorder %s221, %s224
      %p230 = scmp.eq.s32.totalorder %s29, 0
      %p231 = por %p229, %p230
      %p232 = scmp.ne.s32.totalorder %s221, %s224
      %p233 = scmp.eq.s32.totalorder %s34, 1
      %p234 = por %p232, %p233
      %p235 = scmp.ne.s32.totalorder %s224, %s225
      %p236 = scmp.eq.s32.totalorder %s34, 0
      %p237 = por %p235, %p236
      %p238 = scmp.ne.s32.totalorder %s224, %s225
      %p239 = scmp.eq.s32.totalorder %s35, 1
      %p240 = por %p238, %p239
      %p242 = scmp.ne.s32.totalorder %s225, %s241
      %p243 = scmp.eq.s32.totalorder %s35, 0
      %p244 = por %p242, %p243
      %p245 = scmp.le.s32.totalorder 1, %s29
      %p246 = scmp.lt.s32.totalorder %s29, 3
      %p247 = pnand %p245, %p246
      %p248 = pneg %p247
      // Predicated region
      $region9: #{tpu_custom_call.1} parent=5 // pred_check
        _
      $region10: #{tpu_custom_call.1} parent=5 // pred_check_branch
        %250 = sbr.rel (%p247) target = $region12
      $region11: #{tpu_custom_call.1} parent=5 // pred_region
        %s251 = ssub.s32 %s29, 1
      $region12: #{tpu_custom_call.1} parent=5 // pred_fallthru
        _
      %p252 = scmp.lt.s32.totalorder %s29, 2
      // Predicated region
      $region13: #{tpu_custom_call.1} parent=5 // pred_check
        %p253 = pneg %p252
      $region14: #{tpu_custom_call.1} parent=5 // pred_check_branch
        %255 = sbr.rel (%p253) target = $region16
      $region15: #{tpu_custom_call.1} parent=5 // pred_region
        // Predicated region
        $region17: #{tpu_custom_call.1} parent=15 // pred_check
          %p256 = pneg %p49
        $region18: #{tpu_custom_call.1} parent=15 // pred_check_branch
          %258 = sbr.rel (%p256) target = $region20
        $region19: #{tpu_custom_call.1} parent=15 // pred_region
          %s259 = sand.u32 %s39, 1
          %s260 = scalar_lea.sflag [#allocation3], %s259
          %s261 = sand.u32 %s39, 1
          %s262 = smul.addr %s261, 16
          %s263 = scalar_lea.vmem [#allocation2], %s262
          %265 = vsyncadd %s260, 0
          %s266 = smul.addr %s29, 2
          %s267 = smul.addr %s266, 8
          %s268 = scalar_lea.hbm %s0, %s267
          %s269 = sshll.u32 %s268, 4
          %s270 = int_to_ptr.hbm [resolvable:$true] %s269
          %s271 = sshll.u32 %s263, 4
          %s272 = int_to_ptr.vmem [resolvable:$true] %s271
          %277 = dma.hbm_to_vmem [thread:$0]  %s270, 256, %s272, %s260, 128, 128, 8
        $region20: #{tpu_custom_call.1} parent=15 // pred_fallthru
          _
        // Predicated region
        $region21: #{tpu_custom_call.1} parent=15 // pred_check
          %p278 = pneg %p75
        $region22: #{tpu_custom_call.1} parent=15 // pred_check_branch
          %280 = sbr.rel (%p278) target = $region24
        $region23: #{tpu_custom_call.1} parent=15 // pred_region
          %s281 = sand.u32 %s29, 1
          %s282 = scalar_lea.sflag [#allocation6], %s281
          %s283 = sand.u32 %s65, 1
          %s284 = smul.addr %s283, 4
          %s285 = scalar_lea.vmem [#allocation5], %s284
          %287 = vsyncadd %s282, 0
          %s288 = smul.addr %s29, 4
          %s289 = scalar_lea.hbm %s1, %s288
          %s291 = sshll.u32 %s289, 4
          %s292 = int_to_ptr.hbm [resolvable:$true] %s291
          %s293 = sshll.u32 %s285, 4
          %s294 = int_to_ptr.vmem [resolvable:$true] %s293
          %296 = dma.hbm_to_vmem [thread:$0]  %s292, 64, %s294, %s282
        $region24: #{tpu_custom_call.1} parent=15 // pred_fallthru
          _
        // Predicated region
        $region25: #{tpu_custom_call.1} parent=15 // pred_check
          %p297 = pneg %p101
        $region26: #{tpu_custom_call.1} parent=15 // pred_check_branch
          %299 = sbr.rel (%p297) target = $region28
        $region27: #{tpu_custom_call.1} parent=15 // pred_region
          %s300 = sand.u32 %s29, 1
          %s301 = scalar_lea.sflag [#allocation6], %s300
          %s302 = sand.u32 %s91, 1
          %s303 = smul.addr %s302, 4
          %s304 = scalar_lea.vmem [#allocation7], %s303
          %306 = vsyncadd %s301, 0
          %s307 = smul.addr %s29, 4
          %s308 = scalar_lea.hbm %s2, %s307
          %s310 = sshll.u32 %s308, 4
          %s311 = int_to_ptr.hbm [resolvable:$true] %s310
          %s312 = sshll.u32 %s304, 4
          %s313 = int_to_ptr.vmem [resolvable:$true] %s312
          %315 = dma.hbm_to_vmem [thread:$0]  %s311, 64, %s313, %s301
        $region28: #{tpu_custom_call.1} parent=15 // pred_fallthru
          _
      $region16: #{tpu_custom_call.1} parent=5 // pred_fallthru
        _
      %p316 = scmp.le.s32.totalorder 1, %s29
      %p317 = scmp.lt.s32.totalorder %s29, 3
      %p318 = pnand %p316, %p317
      %p319 = pneg %p318
      // Predicated region
      $region29: #{tpu_custom_call.1} parent=5 // pred_check
        _
      $region30: #{tpu_custom_call.1} parent=5 // pred_check_branch
        %321 = sbr.rel (%p318) target = $region32
      $region31: #{tpu_custom_call.1} parent=5 // pred_region
        %s322 = ssub.s32 %s29, 1
        %s323 = sand.u32 %s42, 1
        %s324 = scalar_lea.sflag [#allocation3], %s323
        %s325 = sand.u32 %s42, 1
        %s326 = smul.addr %s325, 16
        %s327 = scalar_lea.vmem [#allocation2], %s326
        // Predicated region
        $region33: #{tpu_custom_call.1} parent=31 // pred_check
          %p328 = pneg %p55
        $region34: #{tpu_custom_call.1} parent=31 // pred_check_branch
          %330 = sbr.rel (%p328) target = $region36
        $region35: #{tpu_custom_call.1} parent=31 // pred_region
          %332 = dma.done %s324, 256
        $region36: #{tpu_custom_call.1} parent=31 // pred_fallthru
          _
        %s333 = sand.u32 %s34, 1
        %s334 = scalar_lea.sflag [#allocation6], %s333
        %s335 = sand.u32 %s68, 1
        %s336 = smul.addr %s335, 4
        %s337 = scalar_lea.vmem [#allocation5], %s336
        // Predicated region
        $region37: #{tpu_custom_call.1} parent=31 // pred_check
          %p338 = pneg %p81
        $region38: #{tpu_custom_call.1} parent=31 // pred_check_branch
          %340 = sbr.rel (%p338) target = $region40
        $region39: #{tpu_custom_call.1} parent=31 // pred_region
          %342 = dma.done %s334, 64
        $region40: #{tpu_custom_call.1} parent=31 // pred_fallthru
          _
        %s343 = sand.u32 %s34, 1
        %s344 = scalar_lea.sflag [#allocation6], %s343
        %s345 = sand.u32 %s94, 1
        %s346 = smul.addr %s345, 4
        %s347 = scalar_lea.vmem [#allocation7], %s346
        // Predicated region
        $region41: #{tpu_custom_call.1} parent=31 // pred_check
          %p348 = pneg %p107
        $region42: #{tpu_custom_call.1} parent=31 // pred_check_branch
          %350 = sbr.rel (%p348) target = $region44
        $region43: #{tpu_custom_call.1} parent=31 // pred_region
          %352 = dma.done %s344, 64
        $region44: #{tpu_custom_call.1} parent=31 // pred_fallthru
          _
        %s353 = sand.u32 %s42, 1
        %s354 = scalar_lea.sflag [#allocation3], %s353
        %s355 = sand.u32 %s42, 1
        %s356 = smul.addr %s355, 16
        %s357 = scalar_lea.vmem [#allocation2], %s356
        %p358 = pneg %p55
        %p359 = pneg %p52
        %s360 = sand.u32 %s34, 1
        %s361 = scalar_lea.sflag [#allocation6], %s360
        %s362 = sand.u32 %s68, 1
        %s363 = smul.addr %s362, 4
        %s364 = scalar_lea.vmem [#allocation5], %s363
        %p365 = pneg %p81
        %p366 = pneg %p78
        %s367 = sand.u32 %s34, 1
        %s368 = scalar_lea.sflag [#allocation6], %s367
        %s369 = sand.u32 %s94, 1
        %s370 = smul.addr %s369, 4
        %s371 = scalar_lea.vmem [#allocation7], %s370
        %p372 = pneg %p107
        %p373 = pneg %p104
        %p374 = pneg %p133
        %p375 = pneg %p130
        %s376 = sand.u32 %s120, 1
        %s377 = scalar_lea.sflag [#allocation4], %s376
        %s378 = sand.u32 %s120, 1
        %s379 = smul.addr %s378, 4
        %s380 = scalar_lea.vmem [#allocation8], %s379
        %p381 = pneg %p159
        %p382 = pneg %p156
        %s383 = sand.u32 %s34, 1
        %s384 = scalar_lea.sflag [#allocation10], %s383
        %s385 = sand.u32 %s146, 1
        %s386 = smul.addr %s385, 4
        %s387 = scalar_lea.vmem [#allocation9], %s386
        %p388 = pneg %p185
        %p389 = pneg %p182
        %s390 = sand.u32 %s34, 1
        %s391 = scalar_lea.sflag [#allocation10], %s390
        %s392 = sand.u32 %s172, 1
        %s393 = smul.addr %s392, 4
        %s394 = scalar_lea.vmem [#allocation11], %s393
        %p395 = pneg %p211
        %p396 = pneg %p208
        %s397 = sand.u32 %s198, 1
        %s398 = scalar_lea.sflag [#allocation13], %s397
        %s399 = sand.u32 %s198, 1
        %s400 = smul.addr %s399, 4
        %s401 = scalar_lea.vmem [#allocation12], %s400
        %p402 = pneg %p237
        %p403 = pneg %p234
        %p404 = scmp.lt.s32.totalorder %s34, 1
        %s405 = scalar_select %p404, %s34, 1
        %s406 = smul.addr %s405, 4
        %s407 = scalar_lea.vmem %s7, %s406
        %p408 = scmp.lt.s32.totalorder %s34, 1
        %s409 = scalar_select %p408, %s34, 1
        %s410 = smul.addr %s409, 4
        %s411 = scalar_lea.vmem %s7, %s410
        %v412 = vld [vmem:[%s327] sm:$0xff]
        %v413 = vld [vmem:[%s327 + $0x8] sm:$0xff]
        %v414 = vmul.f32 %v412, %v412
        %v415 = vmul.f32 %v413, %v413
        %v416 = vld [vmem:[%s337] sm:$0xf]
        %v417 = vld [vmem:[%s347] sm:$0xf]
        %v418 = vrcp.pop %v417
        %v419 = vmul.f32 %v417, %v418
        %v420 = vsub.f32 1.0, %v419
        %v421 = vmul.f32 %v418, %v420
        %v422 = vadd.f32 %v418, %v421
        %vm423 = vweird.f32 %v417
        %vm424 = vweird.f32 %v418
        %vm425 = vmor %vm423, %vm424
        %v426 = vsel %vm425, %v418, %v422
        %v427 = vand.u32 2147483647, %v417
        %vm428 = vcmp.eq.f32.partialorder %v427, 8.507059e+37
        %v429 = vand.u32 %v417, 2147483648
        %v430 = vor.u32 1.1754944e-38, %v429
        %v431 = vsel %vm428, %v430, %v426
        %v432 = vlog2.pop %v417
        %v433 = vmul.f32 %v432, 0.6931472
        %vm434 = vcmask 125952
        %v435 = vsel %vm434, %v433, 0.0
        %436 = vadd.xlane.f32.xlu0 %v435
        %v437 = vpop.xlane.xlu0 %436
        %vm438 = vcmask 130048
        %v440 = vsel %vm438, %v431, 0
        %442 = vmatpush.msra.mxu0 0.0
        %443 = vmatpush.msra.mxu0 0.0
        %444 = vmatpush.msra.mxu0 0.0
        %445 = vmatpush.msra.mxu0 0.0
        %446 = vmatpush.msra.mxu0 0.0
        %447 = vmatpush.msra.mxu0 0.0
        %448 = vmatpush.msra.mxu0 0.0
        %449 = vmatpush.msra.mxu0 0.0
        %450 = vmatpush.msra.mxu0 0.0
        %451 = vmatpush.msra.mxu0 0.0
        %452 = vmatpush.msra.mxu0 0.0
        %453 = vmatpush.msra.mxu0 0.0
        %454 = vmatpush.msra.mxu0 0.0
        %455 = vmatpush.msra.mxu0 0.0
        %456 = vmatpush.msra.mxu0 %v415
        %457 = vmatpush.msra.mxu0 %v414
        %458 = vmatmul.f32.gmra.mxu0 %v440
        %v459 = vpop.f32.mrf.mxu0
        %v460 = vadd.f32 0.0, %v459
        %461 = vdwg.mxu0
        %v462 = vmul.f32 %v416, %v431
        %v464 = vsel %vm438, %v462, 0
        %466 = vmatpush.msra.mxu0 0.0
        %467 = vmatpush.msra.mxu0 0.0
        %468 = vmatpush.msra.mxu0 0.0
        %469 = vmatpush.msra.mxu0 0.0
        %470 = vmatpush.msra.mxu0 0.0
        %471 = vmatpush.msra.mxu0 0.0
        %472 = vmatpush.msra.mxu0 0.0
        %473 = vmatpush.msra.mxu0 0.0
        %474 = vmatpush.msra.mxu0 0.0
        %475 = vmatpush.msra.mxu0 0.0
        %476 = vmatpush.msra.mxu0 0.0
        %477 = vmatpush.msra.mxu0 0.0
        %478 = vmatpush.msra.mxu0 0.0
        %479 = vmatpush.msra.mxu0 0.0
        %480 = vmatpush.msra.mxu0 %v413
        %481 = vmatpush.msra.mxu0 %v412
        %482 = vmatmul.f32.gmra.mxu0 %v464
        %v483 = vpop.f32.mrf.mxu0
        %v484 = vadd.f32 0.0, %v483
        %485 = vdwg.mxu0
        %v486 = vmul.f32 %v484, 2.0
        %v487 = vsub.f32 %v460, %v486
        %v488 = vmul.f32 %v416, %v416
        %v489 = vmul.f32 %v488, %v431
        %v490 = vsel %vm434, %v489, 0.0
        %491 = vadd.xlane.f32.xlu0 %v490
        %v492 = vpop.xlane.xlu0 %491
        %v493 = vadd.f32 %v487, %v492
        %v494 = vadd.f32 %v437, 29.406033
        %v495 = vadd.f32 %v494, %v493
        %v496 = vmul.f32 %v495, -0.5
        %v497 = vmul.f32 %v496, 1.442695
        %v498 = vpow.pop %v497
        %v499 = vadd.f32 %v498, 1e-08
        %vm500 = vcmask 1043456
        %v501 = vsel %vm500, %v499, 0.0
        %v502 = vrot.slane %v501, 4
        %v503 = vadd.f32 %v501, %v502
        %v504 = vrot.slane %v503, 2
        %v505 = vadd.f32 %v503, %v504
        %v506 = vrot.slane %v505, 1
        %v507 = vadd.f32 %v505, %v506
        %v508 = vmax.f32 %v507, 1e-12
        %v509 = vrcp.pop %v508
        %v510 = vmul.f32 %v508, %v509
        %v511 = vsub.f32 1.0, %v510
        %v512 = vmul.f32 %v509, %v511
        %v513 = vadd.f32 %v509, %v512
        %vm514 = vweird.f32 %v508
        %vm515 = vweird.f32 %v509
        %vm516 = vmor %vm514, %vm515
        %v517 = vsel %vm516, %v509, %v513
        %v518 = vand.u32 2147483647, %v508
        %vm519 = vcmp.eq.f32.partialorder %v518, 8.507059e+37
        %v520 = vand.u32 %v508, 2147483648
        %v521 = vor.u32 1.1754944e-38, %v520
        %v522 = vsel %vm519, %v521, %v517
        %v523 = vmul.f32 %v499, %v522
        %v524 = vsel %vm500, %v523, 0.0
        %525 = vadd.xlane.f32.xlu0 %v524
        %v526 = vpop.xlane.xlu0 %525
        %v527 = vrcp.pop %v526
        %v528 = vmul.f32 %v526, %v527
        %v529 = vsub.f32 1.0, %v528
        %v530 = vmul.f32 %v527, %v529
        %v531 = vadd.f32 %v527, %v530
        %vm532 = vweird.f32 %v526
        %vm533 = vweird.f32 %v527
        %vm534 = vmor %vm532, %vm533
        %v535 = vsel %vm534, %v527, %v531
        %v536 = vand.u32 2147483647, %v526
        %vm537 = vcmp.eq.f32.partialorder %v536, 8.507059e+37
        %v538 = vand.u32 %v526, 2147483648
        %v539 = vor.u32 1.1754944e-38, %v538
        %v540 = vsel %vm537, %v539, %v535
        %541 = vmatpush.xpose.msra.mxu0 0.0
        %542 = vmatpush.xpose.msra.mxu0 0.0
        %543 = vmatpush.xpose.msra.mxu0 0.0
        %544 = vmatpush.xpose.msra.mxu0 0.0
        %545 = vmatpush.xpose.msra.mxu0 0.0
        %546 = vmatpush.xpose.msra.mxu0 0.0
        %547 = vmatpush.xpose.msra.mxu0 0.0
        %548 = vmatpush.xpose.msra.mxu0 0.0
        %549 = vmatpush.xpose.msra.mxu0 0.0
        %550 = vmatpush.xpose.msra.mxu0 0.0
        %551 = vmatpush.xpose.msra.mxu0 0.0
        %552 = vmatpush.xpose.msra.mxu0 0.0
        %553 = vmatpush.xpose.msra.mxu0 0.0
        %554 = vmatpush.xpose.msra.mxu0 0.0
        %555 = vmatpush.xpose.msra.mxu0 %v413
        %556 = vmatpush.xpose.msra.mxu0 %v412
        %557 = vmatmul.f32.gmra.mxu0 %v523
        %v558 = vpop.f32.mrf.mxu0
        %v559 = vadd.f32 0.0, %v558
        %560 = vdwg.mxu0
        %v561 = vmul.f32 %v559, %v540
        %v562 = vmul.f32 %v523, %v523
        %563 = vmatpush.xpose.msra.mxu0 0.0
        %564 = vmatpush.xpose.msra.mxu0 0.0
        %565 = vmatpush.xpose.msra.mxu0 0.0
        %566 = vmatpush.xpose.msra.mxu0 0.0
        %567 = vmatpush.xpose.msra.mxu0 0.0
        %568 = vmatpush.xpose.msra.mxu0 0.0
        %569 = vmatpush.xpose.msra.mxu0 0.0
        %570 = vmatpush.xpose.msra.mxu0 0.0
        %571 = vmatpush.xpose.msra.mxu0 0.0
        %572 = vmatpush.xpose.msra.mxu0 0.0
        %573 = vmatpush.xpose.msra.mxu0 0.0
        %574 = vmatpush.xpose.msra.mxu0 0.0
        %575 = vmatpush.xpose.msra.mxu0 0.0
        %576 = vmatpush.xpose.msra.mxu0 0.0
        %577 = vmatpush.xpose.msra.mxu0 %v415
        %578 = vmatpush.xpose.msra.mxu0 %v414
        %579 = vmatmul.f32.gmra.mxu0 %v562
        %v580 = vpop.f32.mrf.mxu0
        %v581 = vadd.f32 0.0, %v580
        %582 = vdwg.mxu0
        %583 = vmatpush.xpose.msra.mxu0 0.0
        %584 = vmatpush.xpose.msra.mxu0 0.0
        %585 = vmatpush.xpose.msra.mxu0 0.0
        %586 = vmatpush.xpose.msra.mxu0 0.0
        %587 = vmatpush.xpose.msra.mxu0 0.0
        %588 = vmatpush.xpose.msra.mxu0 0.0
        %589 = vmatpush.xpose.msra.mxu0 0.0
        %590 = vmatpush.xpose.msra.mxu0 0.0
        %591 = vmatpush.xpose.msra.mxu0 0.0
        %592 = vmatpush.xpose.msra.mxu0 0.0
        %593 = vmatpush.xpose.msra.mxu0 0.0
        %594 = vmatpush.xpose.msra.mxu0 0.0
        %595 = vmatpush.xpose.msra.mxu0 0.0
        %596 = vmatpush.xpose.msra.mxu0 0.0
        %597 = vmatpush.xpose.msra.mxu0 %v413
        %598 = vmatpush.xpose.msra.mxu0 %v412
        %599 = vmatmul.f32.gmra.mxu0 %v562
        %v600 = vpop.f32.mrf.mxu0
        %v601 = vadd.f32 0.0, %v600
        %602 = vdwg.mxu0
        %v603 = vsel %vm500, %v562, 0.0
        %604 = vadd.xlane.f32.xlu0 %v603
        %v605 = vpop.xlane.xlu0 %604
        %v606 = vmul.f32 %v561, 2.0
        %v607 = vmul.f32 %v606, %v601
        %v608 = vsub.f32 %v581, %v607
        %v609 = vmul.f32 %v561, %v561
        %v610 = vmul.f32 %v609, %v605
        %v611 = vadd.f32 %v608, %v610
        %v612 = vmul.f32 %v611, %v540
        %v613 = vmax.f32 %v612, 0.0001
        %v614 = vrcp.pop %v613
        %v615 = vmul.f32 %v613, %v614
        %v616 = vsub.f32 1.0, %v615
        %v617 = vmul.f32 %v614, %v616
        %v618 = vadd.f32 %v614, %v617
        %vm619 = vweird.f32 %v613
        %vm620 = vweird.f32 %v614
        %vm621 = vmor %vm619, %vm620
        %v622 = vsel %vm621, %v614, %v618
        %v623 = vand.u32 2147483647, %v613
        %vm624 = vcmp.eq.f32.partialorder %v623, 8.507059e+37
        %v625 = vand.u32 %v613, 2147483648
        %v626 = vor.u32 1.1754944e-38, %v625
        %v627 = vsel %vm624, %v626, %v622
        %v628 = vlog2.pop %v613
        %v629 = vmul.f32 %v628, 0.6931472
        %v630 = vsel %vm434, %v629, 0.0
        %631 = vadd.xlane.f32.xlu0 %v630
        %v632 = vpop.xlane.xlu0 %631
        %v634 = vsel %vm438, %v627, 0
        %636 = vmatpush.msra.mxu0 0.0
        %637 = vmatpush.msra.mxu0 0.0
        %638 = vmatpush.msra.mxu0 0.0
        %639 = vmatpush.msra.mxu0 0.0
        %640 = vmatpush.msra.mxu0 0.0
        %641 = vmatpush.msra.mxu0 0.0
        %642 = vmatpush.msra.mxu0 0.0
        %643 = vmatpush.msra.mxu0 0.0
        %644 = vmatpush.msra.mxu0 0.0
        %645 = vmatpush.msra.mxu0 0.0
        %646 = vmatpush.msra.mxu0 0.0
        %647 = vmatpush.msra.mxu0 0.0
        %648 = vmatpush.msra.mxu0 0.0
        %649 = vmatpush.msra.mxu0 0.0
        %650 = vmatpush.msra.mxu0 %v415
        %651 = vmatpush.msra.mxu0 %v414
        %652 = vmatmul.f32.gmra.mxu0 %v634
        %v653 = vpop.f32.mrf.mxu0
        %v654 = vadd.f32 0.0, %v653
        %655 = vdwg.mxu0
        %v656 = vmul.f32 %v561, %v627
        %v658 = vsel %vm438, %v656, 0
        %660 = vmatpush.msra.mxu0 0.0
        %661 = vmatpush.msra.mxu0 0.0
        %662 = vmatpush.msra.mxu0 0.0
        %663 = vmatpush.msra.mxu0 0.0
        %664 = vmatpush.msra.mxu0 0.0
        %665 = vmatpush.msra.mxu0 0.0
        %666 = vmatpush.msra.mxu0 0.0
        %667 = vmatpush.msra.mxu0 0.0
        %668 = vmatpush.msra.mxu0 0.0
        %669 = vmatpush.msra.mxu0 0.0
        %670 = vmatpush.msra.mxu0 0.0
        %671 = vmatpush.msra.mxu0 0.0
        %672 = vmatpush.msra.mxu0 0.0
        %673 = vmatpush.msra.mxu0 0.0
        %674 = vmatpush.msra.mxu0 %v413
        %675 = vmatpush.msra.mxu0 %v412
        %676 = vmatmul.f32.gmra.mxu0 %v658
        %v677 = vpop.f32.mrf.mxu0
        %v678 = vadd.f32 0.0, %v677
        %679 = vdwg.mxu0
        %v680 = vmul.f32 %v678, 2.0
        %v681 = vsub.f32 %v654, %v680
        %v682 = vmul.f32 %v609, %v627
        %v683 = vsel %vm434, %v682, 0.0
        %684 = vadd.xlane.f32.xlu0 %v683
        %v685 = vpop.xlane.xlu0 %684
        %v686 = vadd.f32 %v681, %v685
        %v687 = vadd.f32 %v632, 29.406033
        %v688 = vadd.f32 %v687, %v686
        %v689 = vmul.f32 %v688, -0.5
        %v690 = vmul.f32 %v689, 1.442695
        %v691 = vpow.pop %v690
        %v692 = vadd.f32 %v691, 1e-08
        %v693 = vsel %vm500, %v692, 0.0
        %v694 = vrot.slane %v693, 4
        %v695 = vadd.f32 %v693, %v694
        %v696 = vrot.slane %v695, 2
        %v697 = vadd.f32 %v695, %v696
        %v698 = vrot.slane %v697, 1
        %v699 = vadd.f32 %v697, %v698
        %v700 = vmax.f32 %v699, 1e-12
        %v701 = vrcp.pop %v700
        %v702 = vmul.f32 %v700, %v701
        %v703 = vsub.f32 1.0, %v702
        %v704 = vmul.f32 %v701, %v703
        %v705 = vadd.f32 %v701, %v704
        %vm706 = vweird.f32 %v700
        %vm707 = vweird.f32 %v701
        %vm708 = vmor %vm706, %vm707
        %v709 = vsel %vm708, %v701, %v705
        %v710 = vand.u32 2147483647, %v700
        %vm711 = vcmp.eq.f32.partialorder %v710, 8.507059e+37
        %v712 = vand.u32 %v700, 2147483648
        %v713 = vor.u32 1.1754944e-38, %v712
        %v714 = vsel %vm711, %v713, %v709
        %v715 = vmul.f32 %v692, %v714
        %v716 = vsel %vm500, %v715, 0.0
        %717 = vadd.xlane.f32.xlu0 %v716
        %v718 = vpop.xlane.xlu0 %717
        %v719 = vrcp.pop %v718
        %v720 = vmul.f32 %v718, %v719
        %v721 = vsub.f32 1.0, %v720
        %v722 = vmul.f32 %v719, %v721
        %v723 = vadd.f32 %v719, %v722
        %vm724 = vweird.f32 %v718
        %vm725 = vweird.f32 %v719
        %vm726 = vmor %vm724, %vm725
        %v727 = vsel %vm726, %v719, %v723
        %v728 = vand.u32 2147483647, %v718
        %vm729 = vcmp.eq.f32.partialorder %v728, 8.507059e+37
        %v730 = vand.u32 %v718, 2147483648
        %v731 = vor.u32 1.1754944e-38, %v730
        %v732 = vsel %vm729, %v731, %v727
        %733 = vmatpush.xpose.msra.mxu0 0.0
        %734 = vmatpush.xpose.msra.mxu0 0.0
        %735 = vmatpush.xpose.msra.mxu0 0.0
        %736 = vmatpush.xpose.msra.mxu0 0.0
        %737 = vmatpush.xpose.msra.mxu0 0.0
        %738 = vmatpush.xpose.msra.mxu0 0.0
        %739 = vmatpush.xpose.msra.mxu0 0.0
        %740 = vmatpush.xpose.msra.mxu0 0.0
        %741 = vmatpush.xpose.msra.mxu0 0.0
        %742 = vmatpush.xpose.msra.mxu0 0.0
        %743 = vmatpush.xpose.msra.mxu0 0.0
        %744 = vmatpush.xpose.msra.mxu0 0.0
        %745 = vmatpush.xpose.msra.mxu0 0.0
        %746 = vmatpush.xpose.msra.mxu0 0.0
        %747 = vmatpush.xpose.msra.mxu0 %v413
        %748 = vmatpush.xpose.msra.mxu0 %v412
        %749 = vmatmul.f32.gmra.mxu0 %v715
        %v750 = vpop.f32.mrf.mxu0
        %v751 = vadd.f32 0.0, %v750
        %752 = vdwg.mxu0
        %v753 = vmul.f32 %v751, %v732
        %v754 = vmul.f32 %v715, %v715
        %755 = vmatpush.xpose.msra.mxu0 0.0
        %756 = vmatpush.xpose.msra.mxu0 0.0
        %757 = vmatpush.xpose.msra.mxu0 0.0
        %758 = vmatpush.xpose.msra.mxu0 0.0
        %759 = vmatpush.xpose.msra.mxu0 0.0
        %760 = vmatpush.xpose.msra.mxu0 0.0
        %761 = vmatpush.xpose.msra.mxu0 0.0
        %762 = vmatpush.xpose.msra.mxu0 0.0
        %763 = vmatpush.xpose.msra.mxu0 0.0
        %764 = vmatpush.xpose.msra.mxu0 0.0
        %765 = vmatpush.xpose.msra.mxu0 0.0
        %766 = vmatpush.xpose.msra.mxu0 0.0
        %767 = vmatpush.xpose.msra.mxu0 0.0
        %768 = vmatpush.xpose.msra.mxu0 0.0
        %769 = vmatpush.xpose.msra.mxu0 %v415
        %770 = vmatpush.xpose.msra.mxu0 %v414
        %771 = vmatmul.f32.gmra.mxu0 %v754
        %v772 = vpop.f32.mrf.mxu0
        %v773 = vadd.f32 0.0, %v772
        %774 = vdwg.mxu0
        %775 = vmatpush.xpose.msra.mxu0 0.0
        %776 = vmatpush.xpose.msra.mxu0 0.0
        %777 = vmatpush.xpose.msra.mxu0 0.0
        %778 = vmatpush.xpose.msra.mxu0 0.0
        %779 = vmatpush.xpose.msra.mxu0 0.0
        %780 = vmatpush.xpose.msra.mxu0 0.0
        %781 = vmatpush.xpose.msra.mxu0 0.0
        %782 = vmatpush.xpose.msra.mxu0 0.0
        %783 = vmatpush.xpose.msra.mxu0 0.0
        %784 = vmatpush.xpose.msra.mxu0 0.0
        %785 = vmatpush.xpose.msra.mxu0 0.0
        %786 = vmatpush.xpose.msra.mxu0 0.0
        %787 = vmatpush.xpose.msra.mxu0 0.0
        %788 = vmatpush.xpose.msra.mxu0 0.0
        %789 = vmatpush.xpose.msra.mxu0 %v413
        %790 = vmatpush.xpose.msra.mxu0 %v412
        %791 = vmatmul.f32.gmra.mxu0 %v754
        %v792 = vpop.f32.mrf.mxu0
        %v793 = vadd.f32 0.0, %v792
        %794 = vdwg.mxu0
        %v795 = vsel %vm500, %v754, 0.0
        %796 = vadd.xlane.f32.xlu0 %v795
        %v797 = vpop.xlane.xlu0 %796
        %v798 = vmul.f32 %v753, 2.0
        %v799 = vmul.f32 %v798, %v793
        %v800 = vsub.f32 %v773, %v799
        %v801 = vmul.f32 %v753, %v753
        %v802 = vmul.f32 %v801, %v797
        %v803 = vadd.f32 %v800, %v802
        %v804 = vmul.f32 %v803, %v732
        %v805 = vmax.f32 %v804, 0.0001
        %v806 = vrcp.pop %v805
        %v807 = vmul.f32 %v805, %v806
        %v808 = vsub.f32 1.0, %v807
        %v809 = vmul.f32 %v806, %v808
        %v810 = vadd.f32 %v806, %v809
        %vm811 = vweird.f32 %v805
        %vm812 = vweird.f32 %v806
        %vm813 = vmor %vm811, %vm812
        %v814 = vsel %vm813, %v806, %v810
        %v815 = vand.u32 2147483647, %v805
        %vm816 = vcmp.eq.f32.partialorder %v815, 8.507059e+37
        %v817 = vand.u32 %v805, 2147483648
        %v818 = vor.u32 1.1754944e-38, %v817
        %v819 = vsel %vm816, %v818, %v814
        %v820 = vlog2.pop %v805
        %v821 = vmul.f32 %v820, 0.6931472
        %v822 = vsel %vm434, %v821, 0.0
        %823 = vadd.xlane.f32.xlu0 %v822
        %v824 = vpop.xlane.xlu0 %823
        %v826 = vsel %vm438, %v819, 0
        %828 = vmatpush.msra.mxu0 0.0
        %829 = vmatpush.msra.mxu0 0.0
        %830 = vmatpush.msra.mxu0 0.0
        %831 = vmatpush.msra.mxu0 0.0
        %832 = vmatpush.msra.mxu0 0.0
        %833 = vmatpush.msra.mxu0 0.0
        %834 = vmatpush.msra.mxu0 0.0
        %835 = vmatpush.msra.mxu0 0.0
        %836 = vmatpush.msra.mxu0 0.0
        %837 = vmatpush.msra.mxu0 0.0
        %838 = vmatpush.msra.mxu0 0.0
        %839 = vmatpush.msra.mxu0 0.0
        %840 = vmatpush.msra.mxu0 0.0
        %841 = vmatpush.msra.mxu0 0.0
        %842 = vmatpush.msra.mxu0 %v415
        %843 = vmatpush.msra.mxu0 %v414
        %844 = vmatmul.f32.gmra.mxu0 %v826
        %v845 = vpop.f32.mrf.mxu0
        %v846 = vadd.f32 0.0, %v845
        %847 = vdwg.mxu0
        %v848 = vmul.f32 %v753, %v819
        %v850 = vsel %vm438, %v848, 0
        %852 = vmatpush.msra.mxu0 0.0
        %853 = vmatpush.msra.mxu0 0.0
        %854 = vmatpush.msra.mxu0 0.0
        %855 = vmatpush.msra.mxu0 0.0
        %856 = vmatpush.msra.mxu0 0.0
        %857 = vmatpush.msra.mxu0 0.0
        %858 = vmatpush.msra.mxu0 0.0
        %859 = vmatpush.msra.mxu0 0.0
        %860 = vmatpush.msra.mxu0 0.0
        %861 = vmatpush.msra.mxu0 0.0
        %862 = vmatpush.msra.mxu0 0.0
        %863 = vmatpush.msra.mxu0 0.0
        %864 = vmatpush.msra.mxu0 0.0
        %865 = vmatpush.msra.mxu0 0.0
        %866 = vmatpush.msra.mxu0 %v413
        %867 = vmatpush.msra.mxu0 %v412
        %868 = vmatmul.f32.gmra.mxu0 %v850
        %v869 = vpop.f32.mrf.mxu0
        %v870 = vadd.f32 0.0, %v869
        %871 = vdwg.mxu0
        %v872 = vmul.f32 %v870, 2.0
        %v873 = vsub.f32 %v846, %v872
        %v874 = vmul.f32 %v801, %v819
        %v875 = vsel %vm434, %v874, 0.0
        %876 = vadd.xlane.f32.xlu0 %v875
        %v877 = vpop.xlane.xlu0 %876
        %v878 = vadd.f32 %v873, %v877
        %v879 = vadd.f32 %v824, 29.406033
        %v880 = vadd.f32 %v879, %v878
        %v881 = vmul.f32 %v880, -0.5
        %v882 = vmul.f32 %v881, 1.442695
        %v883 = vpow.pop %v882
        %v884 = vadd.f32 %v883, 1e-08
        %v885 = vsel %vm500, %v884, 0.0
        %v886 = vrot.slane %v885, 4
        %v887 = vadd.f32 %v885, %v886
        %v888 = vrot.slane %v887, 2
        %v889 = vadd.f32 %v887, %v888
        %v890 = vrot.slane %v889, 1
        %v891 = vadd.f32 %v889, %v890
        %v892 = vmax.f32 %v891, 1e-12
        %v893 = vrcp.pop %v892
        %v894 = vmul.f32 %v892, %v893
        %v895 = vsub.f32 1.0, %v894
        %v896 = vmul.f32 %v893, %v895
        %v897 = vadd.f32 %v893, %v896
        %vm898 = vweird.f32 %v892
        %vm899 = vweird.f32 %v893
        %vm900 = vmor %vm898, %vm899
        %v901 = vsel %vm900, %v893, %v897
        %v902 = vand.u32 2147483647, %v892
        %vm903 = vcmp.eq.f32.partialorder %v902, 8.507059e+37
        %v904 = vand.u32 %v892, 2147483648
        %v905 = vor.u32 1.1754944e-38, %v904
        %v906 = vsel %vm903, %v905, %v901
        %v907 = vmul.f32 %v884, %v906
        %v908 = vsel %vm500, %v907, 0.0
        %909 = vadd.xlane.f32.xlu0 %v908
        %v910 = vpop.xlane.xlu0 %909
        %v911 = vrcp.pop %v910
        %v912 = vmul.f32 %v910, %v911
        %v913 = vsub.f32 1.0, %v912
        %v914 = vmul.f32 %v911, %v913
        %v915 = vadd.f32 %v911, %v914
        %vm916 = vweird.f32 %v910
        %vm917 = vweird.f32 %v911
        %vm918 = vmor %vm916, %vm917
        %v919 = vsel %vm918, %v911, %v915
        %v920 = vand.u32 2147483647, %v910
        %vm921 = vcmp.eq.f32.partialorder %v920, 8.507059e+37
        %v922 = vand.u32 %v910, 2147483648
        %v923 = vor.u32 1.1754944e-38, %v922
        %v924 = vsel %vm921, %v923, %v919
        %925 = vmatpush.xpose.msra.mxu0 0.0
        %926 = vmatpush.xpose.msra.mxu0 0.0
        %927 = vmatpush.xpose.msra.mxu0 0.0
        %928 = vmatpush.xpose.msra.mxu0 0.0
        %929 = vmatpush.xpose.msra.mxu0 0.0
        %930 = vmatpush.xpose.msra.mxu0 0.0
        %931 = vmatpush.xpose.msra.mxu0 0.0
        %932 = vmatpush.xpose.msra.mxu0 0.0
        %933 = vmatpush.xpose.msra.mxu0 0.0
        %934 = vmatpush.xpose.msra.mxu0 0.0
        %935 = vmatpush.xpose.msra.mxu0 0.0
        %936 = vmatpush.xpose.msra.mxu0 0.0
        %937 = vmatpush.xpose.msra.mxu0 0.0
        %938 = vmatpush.xpose.msra.mxu0 0.0
        %939 = vmatpush.xpose.msra.mxu0 %v413
        %940 = vmatpush.xpose.msra.mxu0 %v412
        %941 = vmatmul.f32.gmra.mxu0 %v907
        %v942 = vpop.f32.mrf.mxu0
        %v943 = vadd.f32 0.0, %v942
        %944 = vdwg.mxu0
        %v945 = vmul.f32 %v943, %v924
        %v946 = vmul.f32 %v907, %v907
        %947 = vmatpush.xpose.msra.mxu0 0.0
        %948 = vmatpush.xpose.msra.mxu0 0.0
        %949 = vmatpush.xpose.msra.mxu0 0.0
        %950 = vmatpush.xpose.msra.mxu0 0.0
        %951 = vmatpush.xpose.msra.mxu0 0.0
        %952 = vmatpush.xpose.msra.mxu0 0.0
        %953 = vmatpush.xpose.msra.mxu0 0.0
        %954 = vmatpush.xpose.msra.mxu0 0.0
        %955 = vmatpush.xpose.msra.mxu0 0.0
        %956 = vmatpush.xpose.msra.mxu0 0.0
        %957 = vmatpush.xpose.msra.mxu0 0.0
        %958 = vmatpush.xpose.msra.mxu0 0.0
        %959 = vmatpush.xpose.msra.mxu0 0.0
        %960 = vmatpush.xpose.msra.mxu0 0.0
        %961 = vmatpush.xpose.msra.mxu0 %v415
        %962 = vmatpush.xpose.msra.mxu0 %v414
        %963 = vmatmul.f32.gmra.mxu0 %v946
        %v964 = vpop.f32.mrf.mxu0
        %v965 = vadd.f32 0.0, %v964
        %966 = vdwg.mxu0
        %967 = vmatpush.xpose.msra.mxu0 0.0
        %968 = vmatpush.xpose.msra.mxu0 0.0
        %969 = vmatpush.xpose.msra.mxu0 0.0
        %970 = vmatpush.xpose.msra.mxu0 0.0
        %971 = vmatpush.xpose.msra.mxu0 0.0
        %972 = vmatpush.xpose.msra.mxu0 0.0
        %973 = vmatpush.xpose.msra.mxu0 0.0
        %974 = vmatpush.xpose.msra.mxu0 0.0
        %975 = vmatpush.xpose.msra.mxu0 0.0
        %976 = vmatpush.xpose.msra.mxu0 0.0
        %977 = vmatpush.xpose.msra.mxu0 0.0
        %978 = vmatpush.xpose.msra.mxu0 0.0
        %979 = vmatpush.xpose.msra.mxu0 0.0
        %980 = vmatpush.xpose.msra.mxu0 0.0
        %981 = vmatpush.xpose.msra.mxu0 %v413
        %982 = vmatpush.xpose.msra.mxu0 %v412
        %983 = vmatmul.f32.gmra.mxu0 %v946
        %v984 = vpop.f32.mrf.mxu0
        %v985 = vadd.f32 0.0, %v984
        %986 = vdwg.mxu0
        %v987 = vsel %vm500, %v946, 0.0
        %988 = vadd.xlane.f32.xlu0 %v987
        %v989 = vpop.xlane.xlu0 %988
        %v990 = vmul.f32 %v945, 2.0
        %v991 = vmul.f32 %v990, %v985
        %v992 = vsub.f32 %v965, %v991
        %v993 = vmul.f32 %v945, %v945
        %v994 = vmul.f32 %v993, %v989
        %v995 = vadd.f32 %v992, %v994
        %v996 = vmul.f32 %v995, %v924
        %v997 = vmax.f32 %v996, 0.0001
        %v998 = vrcp.pop %v997
        %v999 = vmul.f32 %v997, %v998
        %v1000 = vsub.f32 1.0, %v999
        %v1001 = vmul.f32 %v998, %v1000
        %v1002 = vadd.f32 %v998, %v1001
        %vm1003 = vweird.f32 %v997
        %vm1004 = vweird.f32 %v998
        %vm1005 = vmor %vm1003, %vm1004
        %v1006 = vsel %vm1005, %v998, %v1002
        %v1007 = vand.u32 2147483647, %v997
        %vm1008 = vcmp.eq.f32.partialorder %v1007, 8.507059e+37
        %v1009 = vand.u32 %v997, 2147483648
        %v1010 = vor.u32 1.1754944e-38, %v1009
        %v1011 = vsel %vm1008, %v1010, %v1006
        %v1012 = vlog2.pop %v997
        %v1013 = vmul.f32 %v1012, 0.6931472
        %v1014 = vsel %vm434, %v1013, 0.0
        %1015 = vadd.xlane.f32.xlu0 %v1014
        %v1016 = vpop.xlane.xlu0 %1015
        %v1018 = vsel %vm438, %v1011, 0
        %1020 = vmatpush.msra.mxu0 0.0
        %1021 = vmatpush.msra.mxu0 0.0
        %1022 = vmatpush.msra.mxu0 0.0
        %1023 = vmatpush.msra.mxu0 0.0
        %1024 = vmatpush.msra.mxu0 0.0
        %1025 = vmatpush.msra.mxu0 0.0
        %1026 = vmatpush.msra.mxu0 0.0
        %1027 = vmatpush.msra.mxu0 0.0
        %1028 = vmatpush.msra.mxu0 0.0
        %1029 = vmatpush.msra.mxu0 0.0
        %1030 = vmatpush.msra.mxu0 0.0
        %1031 = vmatpush.msra.mxu0 0.0
        %1032 = vmatpush.msra.mxu0 0.0
        %1033 = vmatpush.msra.mxu0 0.0
        %1034 = vmatpush.msra.mxu0 %v415
        %1035 = vmatpush.msra.mxu0 %v414
        %1036 = vmatmul.f32.gmra.mxu0 %v1018
        %v1037 = vpop.f32.mrf.mxu0
        %v1038 = vadd.f32 0.0, %v1037
        %1039 = vdwg.mxu0
        %v1040 = vmul.f32 %v945, %v1011
        %v1042 = vsel %vm438, %v1040, 0
        %1044 = vmatpush.msra.mxu0 0.0
        %1045 = vmatpush.msra.mxu0 0.0
        %1046 = vmatpush.msra.mxu0 0.0
        %1047 = vmatpush.msra.mxu0 0.0
        %1048 = vmatpush.msra.mxu0 0.0
        %1049 = vmatpush.msra.mxu0 0.0
        %1050 = vmatpush.msra.mxu0 0.0
        %1051 = vmatpush.msra.mxu0 0.0
        %1052 = vmatpush.msra.mxu0 0.0
        %1053 = vmatpush.msra.mxu0 0.0
        %1054 = vmatpush.msra.mxu0 0.0
        %1055 = vmatpush.msra.mxu0 0.0
        %1056 = vmatpush.msra.mxu0 0.0
        %1057 = vmatpush.msra.mxu0 0.0
        %1058 = vmatpush.msra.mxu0 %v413
        %1059 = vmatpush.msra.mxu0 %v412
        %1060 = vmatmul.f32.gmra.mxu0 %v1042
        %v1061 = vpop.f32.mrf.mxu0
        %v1062 = vadd.f32 0.0, %v1061
        %1063 = vdwg.mxu0
        %v1064 = vmul.f32 %v1062, 2.0
        %v1065 = vsub.f32 %v1038, %v1064
        %v1066 = vmul.f32 %v993, %v1011
        %v1067 = vsel %vm434, %v1066, 0.0
        %1068 = vadd.xlane.f32.xlu0 %v1067
        %v1069 = vpop.xlane.xlu0 %1068
        %v1070 = vadd.f32 %v1065, %v1069
        %v1071 = vadd.f32 %v1016, 29.406033
        %v1072 = vadd.f32 %v1071, %v1070
        %v1073 = vmul.f32 %v1072, -0.5
        %v1074 = vmul.f32 %v1073, 1.442695
        %v1075 = vpow.pop %v1074
        %v1076 = vadd.f32 %v1075, 1e-08
        %v1077 = vsel %vm500, %v1076, 0.0
        %v1078 = vrot.slane %v1077, 4
        %v1079 = vadd.f32 %v1077, %v1078
        %v1080 = vrot.slane %v1079, 2
        %v1081 = vadd.f32 %v1079, %v1080
        %v1082 = vrot.slane %v1081, 1
        %v1083 = vadd.f32 %v1081, %v1082
        %v1084 = vmax.f32 %v1083, 1e-12
        %v1085 = vrcp.pop %v1084
        %v1086 = vmul.f32 %v1084, %v1085
        %v1087 = vsub.f32 1.0, %v1086
        %v1088 = vmul.f32 %v1085, %v1087
        %v1089 = vadd.f32 %v1085, %v1088
        %vm1090 = vweird.f32 %v1084
        %vm1091 = vweird.f32 %v1085
        %vm1092 = vmor %vm1090, %vm1091
        %v1093 = vsel %vm1092, %v1085, %v1089
        %v1094 = vand.u32 2147483647, %v1084
        %vm1095 = vcmp.eq.f32.partialorder %v1094, 8.507059e+37
        %v1096 = vand.u32 %v1084, 2147483648
        %v1097 = vor.u32 1.1754944e-38, %v1096
        %v1098 = vsel %vm1095, %v1097, %v1093
        %v1099 = vmul.f32 %v1076, %v1098
        %v1100 = vsel %vm500, %v1099, 0.0
        %1101 = vadd.xlane.f32.xlu0 %v1100
        %v1102 = vpop.xlane.xlu0 %1101
        %v1103 = vrcp.pop %v1102
        %v1104 = vmul.f32 %v1102, %v1103
        %v1105 = vsub.f32 1.0, %v1104
        %v1106 = vmul.f32 %v1103, %v1105
        %v1107 = vadd.f32 %v1103, %v1106
        %vm1108 = vweird.f32 %v1102
        %vm1109 = vweird.f32 %v1103
        %vm1110 = vmor %vm1108, %vm1109
        %v1111 = vsel %vm1110, %v1103, %v1107
        %v1112 = vand.u32 2147483647, %v1102
        %vm1113 = vcmp.eq.f32.partialorder %v1112, 8.507059e+37
        %v1114 = vand.u32 %v1102, 2147483648
        %v1115 = vor.u32 1.1754944e-38, %v1114
        %v1116 = vsel %vm1113, %v1115, %v1111
        %1117 = vmatpush.xpose.msra.mxu0 0.0
        %1118 = vmatpush.xpose.msra.mxu0 0.0
        %1119 = vmatpush.xpose.msra.mxu0 0.0
        %1120 = vmatpush.xpose.msra.mxu0 0.0
        %1121 = vmatpush.xpose.msra.mxu0 0.0
        %1122 = vmatpush.xpose.msra.mxu0 0.0
        %1123 = vmatpush.xpose.msra.mxu0 0.0
        %1124 = vmatpush.xpose.msra.mxu0 0.0
        %1125 = vmatpush.xpose.msra.mxu0 0.0
        %1126 = vmatpush.xpose.msra.mxu0 0.0
        %1127 = vmatpush.xpose.msra.mxu0 0.0
        %1128 = vmatpush.xpose.msra.mxu0 0.0
        %1129 = vmatpush.xpose.msra.mxu0 0.0
        %1130 = vmatpush.xpose.msra.mxu0 0.0
        %1131 = vmatpush.xpose.msra.mxu0 %v413
        %1132 = vmatpush.xpose.msra.mxu0 %v412
        %1133 = vmatmul.f32.gmra.mxu0 %v1099
        %v1134 = vpop.f32.mrf.mxu0
        %v1135 = vadd.f32 0.0, %v1134
        %1136 = vdwg.mxu0
        %v1137 = vmul.f32 %v1135, %v1116
        %v1138 = vmul.f32 %v1099, %v1099
        %1139 = vmatpush.xpose.msra.mxu0 0.0
        %1140 = vmatpush.xpose.msra.mxu0 0.0
        %1141 = vmatpush.xpose.msra.mxu0 0.0
        %1142 = vmatpush.xpose.msra.mxu0 0.0
        %1143 = vmatpush.xpose.msra.mxu0 0.0
        %1144 = vmatpush.xpose.msra.mxu0 0.0
        %1145 = vmatpush.xpose.msra.mxu0 0.0
        %1146 = vmatpush.xpose.msra.mxu0 0.0
        %1147 = vmatpush.xpose.msra.mxu0 0.0
        %1148 = vmatpush.xpose.msra.mxu0 0.0
        %1149 = vmatpush.xpose.msra.mxu0 0.0
        %1150 = vmatpush.xpose.msra.mxu0 0.0
        %1151 = vmatpush.xpose.msra.mxu0 0.0
        %1152 = vmatpush.xpose.msra.mxu0 0.0
        %1153 = vmatpush.xpose.msra.mxu0 %v415
        %1154 = vmatpush.xpose.msra.mxu0 %v414
        %1155 = vmatmul.f32.gmra.mxu0 %v1138
        %v1156 = vpop.f32.mrf.mxu0
        %v1157 = vadd.f32 0.0, %v1156
        %1158 = vdwg.mxu0
        %1159 = vmatpush.xpose.msra.mxu0 0.0
        %1160 = vmatpush.xpose.msra.mxu0 0.0
        %1161 = vmatpush.xpose.msra.mxu0 0.0
        %1162 = vmatpush.xpose.msra.mxu0 0.0
        %1163 = vmatpush.xpose.msra.mxu0 0.0
        %1164 = vmatpush.xpose.msra.mxu0 0.0
        %1165 = vmatpush.xpose.msra.mxu0 0.0
        %1166 = vmatpush.xpose.msra.mxu0 0.0
        %1167 = vmatpush.xpose.msra.mxu0 0.0
        %1168 = vmatpush.xpose.msra.mxu0 0.0
        %1169 = vmatpush.xpose.msra.mxu0 0.0
        %1170 = vmatpush.xpose.msra.mxu0 0.0
        %1171 = vmatpush.xpose.msra.mxu0 0.0
        %1172 = vmatpush.xpose.msra.mxu0 0.0
        %1173 = vmatpush.xpose.msra.mxu0 %v413
        %1174 = vmatpush.xpose.msra.mxu0 %v412
        %1175 = vmatmul.f32.gmra.mxu0 %v1138
        %v1176 = vpop.f32.mrf.mxu0
        %v1177 = vadd.f32 0.0, %v1176
        %1178 = vdwg.mxu0
        %v1179 = vsel %vm500, %v1138, 0.0
        %1180 = vadd.xlane.f32.xlu0 %v1179
        %v1181 = vpop.xlane.xlu0 %1180
        %v1182 = vmul.f32 %v1137, 2.0
        %v1183 = vmul.f32 %v1182, %v1177
        %v1184 = vsub.f32 %v1157, %v1183
        %v1185 = vmul.f32 %v1137, %v1137
        %v1186 = vmul.f32 %v1185, %v1181
        %v1187 = vadd.f32 %v1184, %v1186
        %v1188 = vmul.f32 %v1187, %v1116
        %v1189 = vmax.f32 %v1188, 0.0001
        %v1190 = vrcp.pop %v1189
        %v1191 = vmul.f32 %v1189, %v1190
        %v1192 = vsub.f32 1.0, %v1191
        %v1193 = vmul.f32 %v1190, %v1192
        %v1194 = vadd.f32 %v1190, %v1193
        %vm1195 = vweird.f32 %v1189
        %vm1196 = vweird.f32 %v1190
        %vm1197 = vmor %vm1195, %vm1196
        %v1198 = vsel %vm1197, %v1190, %v1194
        %v1199 = vand.u32 2147483647, %v1189
        %vm1200 = vcmp.eq.f32.partialorder %v1199, 8.507059e+37
        %v1201 = vand.u32 %v1189, 2147483648
        %v1202 = vor.u32 1.1754944e-38, %v1201
        %v1203 = vsel %vm1200, %v1202, %v1198
        %v1204 = vlog2.pop %v1189
        %v1205 = vmul.f32 %v1204, 0.6931472
        %v1206 = vsel %vm434, %v1205, 0.0
        %1207 = vadd.xlane.f32.xlu0 %v1206
        %v1208 = vpop.xlane.xlu0 %1207
        %v1210 = vsel %vm438, %v1203, 0
        %1212 = vmatpush.msra.mxu0 0.0
        %1213 = vmatpush.msra.mxu0 0.0
        %1214 = vmatpush.msra.mxu0 0.0
        %1215 = vmatpush.msra.mxu0 0.0
        %1216 = vmatpush.msra.mxu0 0.0
        %1217 = vmatpush.msra.mxu0 0.0
        %1218 = vmatpush.msra.mxu0 0.0
        %1219 = vmatpush.msra.mxu0 0.0
        %1220 = vmatpush.msra.mxu0 0.0
        %1221 = vmatpush.msra.mxu0 0.0
        %1222 = vmatpush.msra.mxu0 0.0
        %1223 = vmatpush.msra.mxu0 0.0
        %1224 = vmatpush.msra.mxu0 0.0
        %1225 = vmatpush.msra.mxu0 0.0
        %1226 = vmatpush.msra.mxu0 %v415
        %1227 = vmatpush.msra.mxu0 %v414
        %1228 = vmatmul.f32.gmra.mxu0 %v1210
        %v1229 = vpop.f32.mrf.mxu0
        %v1230 = vadd.f32 0.0, %v1229
        %1231 = vdwg.mxu0
        %v1232 = vmul.f32 %v1137, %v1203
        %v1234 = vsel %vm438, %v1232, 0
        %1236 = vmatpush.msra.mxu0 0.0
        %1237 = vmatpush.msra.mxu0 0.0
        %1238 = vmatpush.msra.mxu0 0.0
        %1239 = vmatpush.msra.mxu0 0.0
        %1240 = vmatpush.msra.mxu0 0.0
        %1241 = vmatpush.msra.mxu0 0.0
        %1242 = vmatpush.msra.mxu0 0.0
        %1243 = vmatpush.msra.mxu0 0.0
        %1244 = vmatpush.msra.mxu0 0.0
        %1245 = vmatpush.msra.mxu0 0.0
        %1246 = vmatpush.msra.mxu0 0.0
        %1247 = vmatpush.msra.mxu0 0.0
        %1248 = vmatpush.msra.mxu0 0.0
        %1249 = vmatpush.msra.mxu0 0.0
        %1250 = vmatpush.msra.mxu0 %v413
        %1251 = vmatpush.msra.mxu0 %v412
        %1252 = vmatmul.f32.gmra.mxu0 %v1234
        %v1253 = vpop.f32.mrf.mxu0
        %v1254 = vadd.f32 0.0, %v1253
        %1255 = vdwg.mxu0
        %v1256 = vmul.f32 %v1254, 2.0
        %v1257 = vsub.f32 %v1230, %v1256
        %v1258 = vmul.f32 %v1185, %v1203
        %v1259 = vsel %vm434, %v1258, 0.0
        %1260 = vadd.xlane.f32.xlu0 %v1259
        %v1261 = vpop.xlane.xlu0 %1260
        %v1262 = vadd.f32 %v1257, %v1261
        %v1263 = vadd.f32 %v1208, 29.406033
        %v1264 = vadd.f32 %v1263, %v1262
        %v1265 = vmul.f32 %v1264, -0.5
        %v1266 = vmul.f32 %v1265, 1.442695
        %v1267 = vpow.pop %v1266
        %v1268 = vadd.f32 %v1267, 1e-08
        %v1269 = vsel %vm500, %v1268, 0.0
        %v1270 = vrot.slane %v1269, 4
        %v1271 = vadd.f32 %v1269, %v1270
        %v1272 = vrot.slane %v1271, 2
        %v1273 = vadd.f32 %v1271, %v1272
        %v1274 = vrot.slane %v1273, 1
        %v1275 = vadd.f32 %v1273, %v1274
        %v1276 = vmax.f32 %v1275, 1e-12
        %v1277 = vrcp.pop %v1276
        %v1278 = vmul.f32 %v1276, %v1277
        %v1279 = vsub.f32 1.0, %v1278
        %v1280 = vmul.f32 %v1277, %v1279
        %v1281 = vadd.f32 %v1277, %v1280
        %vm1282 = vweird.f32 %v1276
        %vm1283 = vweird.f32 %v1277
        %vm1284 = vmor %vm1282, %vm1283
        %v1285 = vsel %vm1284, %v1277, %v1281
        %v1286 = vand.u32 2147483647, %v1276
        %vm1287 = vcmp.eq.f32.partialorder %v1286, 8.507059e+37
        %v1288 = vand.u32 %v1276, 2147483648
        %v1289 = vor.u32 1.1754944e-38, %v1288
        %v1290 = vsel %vm1287, %v1289, %v1285
        %v1291 = vmul.f32 %v1268, %v1290
        %v1292 = vsel %vm500, %v1291, 0.0
        %1293 = vadd.xlane.f32.xlu0 %v1292
        %v1294 = vpop.xlane.xlu0 %1293
        %v1295 = vrcp.pop %v1294
        %v1296 = vmul.f32 %v1294, %v1295
        %v1297 = vsub.f32 1.0, %v1296
        %v1298 = vmul.f32 %v1295, %v1297
        %v1299 = vadd.f32 %v1295, %v1298
        %vm1300 = vweird.f32 %v1294
        %vm1301 = vweird.f32 %v1295
        %vm1302 = vmor %vm1300, %vm1301
        %v1303 = vsel %vm1302, %v1295, %v1299
        %v1304 = vand.u32 2147483647, %v1294
        %vm1305 = vcmp.eq.f32.partialorder %v1304, 8.507059e+37
        %v1306 = vand.u32 %v1294, 2147483648
        %v1307 = vor.u32 1.1754944e-38, %v1306
        %v1308 = vsel %vm1305, %v1307, %v1303
        %1309 = vmatpush.xpose.msra.mxu0 0.0
        %1310 = vmatpush.xpose.msra.mxu0 0.0
        %1311 = vmatpush.xpose.msra.mxu0 0.0
        %1312 = vmatpush.xpose.msra.mxu0 0.0
        %1313 = vmatpush.xpose.msra.mxu0 0.0
        %1314 = vmatpush.xpose.msra.mxu0 0.0
        %1315 = vmatpush.xpose.msra.mxu0 0.0
        %1316 = vmatpush.xpose.msra.mxu0 0.0
        %1317 = vmatpush.xpose.msra.mxu0 0.0
        %1318 = vmatpush.xpose.msra.mxu0 0.0
        %1319 = vmatpush.xpose.msra.mxu0 0.0
        %1320 = vmatpush.xpose.msra.mxu0 0.0
        %1321 = vmatpush.xpose.msra.mxu0 0.0
        %1322 = vmatpush.xpose.msra.mxu0 0.0
        %1323 = vmatpush.xpose.msra.mxu0 %v413
        %1324 = vmatpush.xpose.msra.mxu0 %v412
        %1325 = vmatmul.f32.gmra.mxu0 %v1291
        %v1326 = vpop.f32.mrf.mxu0
        %v1327 = vadd.f32 0.0, %v1326
        %1328 = vdwg.mxu0
        %v1329 = vmul.f32 %v1327, %v1308
        %v1330 = vmul.f32 %v1291, %v1291
        %1331 = vmatpush.xpose.msra.mxu0 0.0
        %1332 = vmatpush.xpose.msra.mxu0 0.0
        %1333 = vmatpush.xpose.msra.mxu0 0.0
        %1334 = vmatpush.xpose.msra.mxu0 0.0
        %1335 = vmatpush.xpose.msra.mxu0 0.0
        %1336 = vmatpush.xpose.msra.mxu0 0.0
        %1337 = vmatpush.xpose.msra.mxu0 0.0
        %1338 = vmatpush.xpose.msra.mxu0 0.0
        %1339 = vmatpush.xpose.msra.mxu0 0.0
        %1340 = vmatpush.xpose.msra.mxu0 0.0
        %1341 = vmatpush.xpose.msra.mxu0 0.0
        %1342 = vmatpush.xpose.msra.mxu0 0.0
        %1343 = vmatpush.xpose.msra.mxu0 0.0
        %1344 = vmatpush.xpose.msra.mxu0 0.0
        %1345 = vmatpush.xpose.msra.mxu0 %v415
        %1346 = vmatpush.xpose.msra.mxu0 %v414
        %1347 = vmatmul.f32.gmra.mxu0 %v1330
        %v1348 = vpop.f32.mrf.mxu0
        %v1349 = vadd.f32 0.0, %v1348
        %1350 = vdwg.mxu0
        %1351 = vmatpush.xpose.msra.mxu0 0.0
        %1352 = vmatpush.xpose.msra.mxu0 0.0
        %1353 = vmatpush.xpose.msra.mxu0 0.0
        %1354 = vmatpush.xpose.msra.mxu0 0.0
        %1355 = vmatpush.xpose.msra.mxu0 0.0
        %1356 = vmatpush.xpose.msra.mxu0 0.0
        %1357 = vmatpush.xpose.msra.mxu0 0.0
        %1358 = vmatpush.xpose.msra.mxu0 0.0
        %1359 = vmatpush.xpose.msra.mxu0 0.0
        %1360 = vmatpush.xpose.msra.mxu0 0.0
        %1361 = vmatpush.xpose.msra.mxu0 0.0
        %1362 = vmatpush.xpose.msra.mxu0 0.0
        %1363 = vmatpush.xpose.msra.mxu0 0.0
        %1364 = vmatpush.xpose.msra.mxu0 0.0
        %1365 = vmatpush.xpose.msra.mxu0 %v413
        %1366 = vmatpush.xpose.msra.mxu0 %v412
        %1367 = vmatmul.f32.gmra.mxu0 %v1330
        %v1368 = vpop.f32.mrf.mxu0
        %v1369 = vadd.f32 0.0, %v1368
        %1370 = vdwg.mxu0
        %v1371 = vsel %vm500, %v1330, 0.0
        %1372 = vadd.xlane.f32.xlu0 %v1371
        %v1373 = vpop.xlane.xlu0 %1372
        %v1374 = vmul.f32 %v1329, 2.0
        %v1375 = vmul.f32 %v1374, %v1369
        %v1376 = vsub.f32 %v1349, %v1375
        %v1377 = vmul.f32 %v1329, %v1329
        %v1378 = vmul.f32 %v1377, %v1373
        %v1379 = vadd.f32 %v1376, %v1378
        %v1380 = vmul.f32 %v1379, %v1308
        %v1381 = vmax.f32 %v1380, 0.0001
        %1382 = vst [vmem:[%s380] sm:$0xf] %v1291
        %1383 = vst [vmem:[%s387] sm:$0xf] %v1265
        %1384 = vst.msk [vmem:[%s394] sm:$0xf] %vm434, %v1329
        %1385 = vst.msk [vmem:[%s401] sm:$0xf] %vm434, %v1381
        %vm1386 = vcmask 3072
        %1387 = vst.msk [vmem:[%s411] sm:$0xf] %vm1386, %v1294
        %s1388 = sand.u32 %s120, 1
        %s1389 = scalar_lea.sflag [#allocation4], %s1388
        %s1390 = sand.u32 %s120, 1
        %s1391 = smul.addr %s1390, 4
        %s1392 = scalar_lea.vmem [#allocation8], %s1391
        %s1393 = sand.u32 %s34, 1
        %s1394 = scalar_lea.sflag [#allocation10], %s1393
        %s1395 = sand.u32 %s146, 1
        %s1396 = smul.addr %s1395, 4
        %s1397 = scalar_lea.vmem [#allocation9], %s1396
        %s1398 = sand.u32 %s34, 1
        %s1399 = scalar_lea.sflag [#allocation10], %s1398
        %s1400 = sand.u32 %s172, 1
        %s1401 = smul.addr %s1400, 4
        %s1402 = scalar_lea.vmem [#allocation11], %s1401
        %s1403 = sand.u32 %s198, 1
        %s1404 = scalar_lea.sflag [#allocation13], %s1403
        %s1405 = sand.u32 %s198, 1
        %s1406 = smul.addr %s1405, 4
        %s1407 = scalar_lea.vmem [#allocation12], %s1406
        %p1408 = scmp.lt.s32.totalorder %s34, 1
        %s1409 = scalar_select %p1408, %s34, 1
        %s1410 = smul.addr %s1409, 4
        %s1411 = scalar_lea.vmem %s7, %s1410
        // Predicated region
        $region45: #{tpu_custom_call.1} parent=31 // pred_check
          %p1412 = pneg %p130
        $region46: #{tpu_custom_call.1} parent=31 // pred_check_branch
          %1414 = sbr.rel (%p1412) target = $region48
        $region47: #{tpu_custom_call.1} parent=31 // pred_region
          %1416 = vsyncadd %s1389, 0
          %s1417 = smul.addr %s34, 4
          %s1418 = scalar_lea.hbm %s3, %s1417
          %s1420 = sshll.u32 %s1392, 4
          %s1421 = int_to_ptr.vmem [resolvable:$true] %s1420
          %s1422 = sshll.u32 %s1418, 4
          %s1423 = int_to_ptr.hbm [resolvable:$true] %s1422
          %1425 = dma.vmem_to_hbm [thread:$0]  %s1421, 64, %s1423, %s1389
        $region48: #{tpu_custom_call.1} parent=31 // pred_fallthru
          _
        // Predicated region
        $region49: #{tpu_custom_call.1} parent=31 // pred_check
          %p1426 = pneg %p156
        $region50: #{tpu_custom_call.1} parent=31 // pred_check_branch
          %1428 = sbr.rel (%p1426) target = $region52
        $region51: #{tpu_custom_call.1} parent=31 // pred_region
          %1430 = vsyncadd %s1394, 0
          %s1431 = smul.addr %s34, 4
          %s1432 = scalar_lea.hbm %s4, %s1431
          %s1434 = sshll.u32 %s1397, 4
          %s1435 = int_to_ptr.vmem [resolvable:$true] %s1434
          %s1436 = sshll.u32 %s1432, 4
          %s1437 = int_to_ptr.hbm [resolvable:$true] %s1436
          %1439 = dma.vmem_to_hbm [thread:$0]  %s1435, 64, %s1437, %s1394
        $region52: #{tpu_custom_call.1} parent=31 // pred_fallthru
          _
        // Predicated region
        $region53: #{tpu_custom_call.1} parent=31 // pred_check
          %p1440 = pneg %p182
        $region54: #{tpu_custom_call.1} parent=31 // pred_check_branch
          %1442 = sbr.rel (%p1440) target = $region56
        $region55: #{tpu_custom_call.1} parent=31 // pred_region
          %1444 = vsyncadd %s1399, 0
          %s1445 = smul.addr %s34, 4
          %s1446 = scalar_lea.hbm %s5, %s1445
          %s1448 = sshll.u32 %s1402, 4
          %s1449 = int_to_ptr.vmem [resolvable:$true] %s1448
          %s1450 = sshll.u32 %s1446, 4
          %s1451 = int_to_ptr.hbm [resolvable:$true] %s1450
          %1453 = dma.vmem_to_hbm [thread:$0]  %s1449, 64, %s1451, %s1399
        $region56: #{tpu_custom_call.1} parent=31 // pred_fallthru
          _
        // Predicated region
        $region57: #{tpu_custom_call.1} parent=31 // pred_check
          %p1454 = pneg %p208
        $region58: #{tpu_custom_call.1} parent=31 // pred_check_branch
          %1456 = sbr.rel (%p1454) target = $region60
        $region59: #{tpu_custom_call.1} parent=31 // pred_region
          %1458 = vsyncadd %s1404, 0
          %s1459 = smul.addr %s34, 4
          %s1460 = scalar_lea.hbm %s6, %s1459
          %s1462 = sshll.u32 %s1407, 4
          %s1463 = int_to_ptr.vmem [resolvable:$true] %s1462
          %s1464 = sshll.u32 %s1460, 4
          %s1465 = int_to_ptr.hbm [resolvable:$true] %s1464
          %1467 = dma.vmem_to_hbm [thread:$0]  %s1463, 64, %s1465, %s1404
        $region60: #{tpu_custom_call.1} parent=31 // pred_fallthru
          _
        // Predicated region
        $region61: #{tpu_custom_call.1} parent=31 // pred_check
          %p1468 = pneg %p234
        $region62: #{tpu_custom_call.1} parent=31 // pred_check_branch
          %1470 = sbr.rel (%p1468) target = $region64
        $region63: #{tpu_custom_call.1} parent=31 // pred_region
          _
        $region64: #{tpu_custom_call.1} parent=31 // pred_fallthru
          _
      $region32: #{tpu_custom_call.1} parent=5 // pred_fallthru
        _
      %p1471 = scmp.le.s32.totalorder 2, %s29
      // Predicated region
      $region65: #{tpu_custom_call.1} parent=5 // pred_check
        %p1472 = pneg %p1471
      $region66: #{tpu_custom_call.1} parent=5 // pred_check_branch
        %1474 = sbr.rel (%p1472) target = $region68
      $region67: #{tpu_custom_call.1} parent=5 // pred_region
        %s1475 = ssub.s32 %s29, 2
        // Predicated region
        $region69: #{tpu_custom_call.1} parent=67 // pred_check
          %p1476 = pneg %p136
        $region70: #{tpu_custom_call.1} parent=67 // pred_check_branch
          %1478 = sbr.rel (%p1476) target = $region72
        $region71: #{tpu_custom_call.1} parent=67 // pred_region
          %s1479 = sand.u32 %s121, 1
          %s1480 = scalar_lea.sflag [#allocation4], %s1479
          %s1481 = sand.u32 %s121, 1
          %s1482 = smul.addr %s1481, 4
          %s1483 = scalar_lea.vmem [#allocation8], %s1482
          %1485 = dma.done %s1480, 64
        $region72: #{tpu_custom_call.1} parent=67 // pred_fallthru
          _
        // Predicated region
        $region73: #{tpu_custom_call.1} parent=67 // pred_check
          %p1486 = pneg %p162
        $region74: #{tpu_custom_call.1} parent=67 // pred_check_branch
          %1488 = sbr.rel (%p1486) target = $region76
        $region75: #{tpu_custom_call.1} parent=67 // pred_region
          %s1489 = sand.u32 %s35, 1
          %s1490 = scalar_lea.sflag [#allocation10], %s1489
          %s1491 = sand.u32 %s147, 1
          %s1492 = smul.addr %s1491, 4
          %s1493 = scalar_lea.vmem [#allocation9], %s1492
          %1495 = dma.done %s1490, 64
        $region76: #{tpu_custom_call.1} parent=67 // pred_fallthru
          _
        // Predicated region
        $region77: #{tpu_custom_call.1} parent=67 // pred_check
          %p1496 = pneg %p188
        $region78: #{tpu_custom_call.1} parent=67 // pred_check_branch
          %1498 = sbr.rel (%p1496) target = $region80
        $region79: #{tpu_custom_call.1} parent=67 // pred_region
          %s1499 = sand.u32 %s35, 1
          %s1500 = scalar_lea.sflag [#allocation10], %s1499
          %s1501 = sand.u32 %s173, 1
          %s1502 = smul.addr %s1501, 4
          %s1503 = scalar_lea.vmem [#allocation11], %s1502
          %1505 = dma.done %s1500, 64
        $region80: #{tpu_custom_call.1} parent=67 // pred_fallthru
          _
        // Predicated region
        $region81: #{tpu_custom_call.1} parent=67 // pred_check
          %p1506 = pneg %p214
        $region82: #{tpu_custom_call.1} parent=67 // pred_check_branch
          %1508 = sbr.rel (%p1506) target = $region84
        $region83: #{tpu_custom_call.1} parent=67 // pred_region
          %s1509 = sand.u32 %s199, 1
          %s1510 = scalar_lea.sflag [#allocation13], %s1509
          %s1511 = sand.u32 %s199, 1
          %s1512 = smul.addr %s1511, 4
          %s1513 = scalar_lea.vmem [#allocation12], %s1512
          %1515 = dma.done %s1510, 64
        $region84: #{tpu_custom_call.1} parent=67 // pred_fallthru
          _
        // Predicated region
        $region85: #{tpu_custom_call.1} parent=67 // pred_check
          %p1516 = pneg %p240
        $region86: #{tpu_custom_call.1} parent=67 // pred_check_branch
          %1518 = sbr.rel (%p1516) target = $region88
        $region87: #{tpu_custom_call.1} parent=67 // pred_region
          %p1519 = scmp.lt.s32.totalorder %s35, 1
          %s1520 = scalar_select %p1519, %s35, 1
          %s1521 = smul.addr %s1520, 4
          %s1522 = scalar_lea.vmem %s7, %s1521
        $region88: #{tpu_custom_call.1} parent=67 // pred_fallthru
          _
      $region68: #{tpu_custom_call.1} parent=5 // pred_fallthru
        _
    $region6: #{tpu_custom_call.1} parent=1 // loop_footer
      %s33 = sadd.s32 1, %s29
    $region7: #{tpu_custom_call.1} parent=1 // loop_footer_branch
      %28 = sbr.rel target = $region3
    $region8: #{tpu_custom_call.1} parent=1 // loop_exit
      _
    %1523 = vsyncpa [#allocation3], 1
    %s1524 = scalar_lea.sflag [#allocation3], 1
    %1525 = vsyncpa %s1524, 1
    %1526 = vsyncpa [#allocation6], 1
    %s1527 = scalar_lea.sflag [#allocation6], 1
    %1528 = vsyncpa %s1527, 1
    %1529 = vsyncpa [#allocation4], 1
    %s1530 = scalar_lea.sflag [#allocation4], 1
    %1531 = vsyncpa %s1530, 1
    %1532 = vsyncpa [#allocation10], 1
    %s1533 = scalar_lea.sflag [#allocation10], 1
    %1534 = vsyncpa %s1533, 1
    %1535 = vsyncpa [#allocation13], 1
    %s1536 = scalar_lea.sflag [#allocation13], 1
    %1537 = vsyncpa %s1536, 1

</llo_original>
